<compile_context>
chip_gen: v5e
topology: v5e:2x2
jax: 0.10.0
libtpu: 0.0.40
codegen_flags: <defaults>
</compile_context>

<pallas_src>
import math

import jax
import jax.numpy as jnp
from jax.experimental import pallas as pl

# ----- small, ViT-consistent config -----
B = 2            # batch
S = 8            # sequence length (num patches + cls, synthetic)
H = 32           # hidden_size
NUM_HEADS = 2    # num_attention_heads
HEAD_DIM = H // NUM_HEADS
INTER = 64       # intermediate_size
NUM_LAYERS = 2   # num_hidden_layers
LN_EPS = 1e-12   # HF ViT layer_norm_eps default
VEC_W = 3 * H    # lane width of the packed bias/LN slab
M = B * S        # tokens folded into the matmul M dimension
N_VEC_ROWS = 8   # packed bias/LN rows per layer


def _layernorm(x, gamma, beta):
    mu = jnp.mean(x, axis=-1, keepdims=True)
    xc = x - mu
    var = jnp.mean(xc * xc, axis=-1, keepdims=True)
    return xc * jax.lax.rsqrt(var + LN_EPS) * gamma + beta


def vit_encoder_kernel(x_ref, wqkv_ref, wo_ref, wi_ref, wf_ref, vec_ref, out_ref):
    """All B*S tokens through all NUM_LAYERS ViTLayers, fully VMEM-resident."""
    h = x_ref[...]                                  # (M, H), M = B*S

    for layer in range(NUM_LAYERS):                 # static unroll (NUM_LAYERS small)
        wqkv = wqkv_ref[layer]                      # (H, 3H)  [wq*scale | wk | wv]
        wo = wo_ref[layer]                          # (H, H)
        wi = wi_ref[layer]                          # (H, INTER)
        wf = wf_ref[layer]                          # (INTER, H)

        def row(r, width, _layer=layer):
            # Rows are pre-broadcast to (M, VEC_W) at pack time -> no in-kernel
            # sublane replication; static index + static lane slice only.
            return vec_ref[_layer * N_VEC_ROWS + r][:, :width]

        bqkv = row(0, 3 * H)                        # (M, 3H), Q part pre-scaled
        bo = row(1, H)
        bi = row(2, INTER)
        bf = row(3, H)
        ln1_g = row(4, H)
        ln1_b = row(5, H)
        ln2_g = row(6, H)
        ln2_b = row(7, H)

        # ---- layernorm_before (all tokens at once) ----
        hn = _layernorm(h, ln1_g, ln1_b)

        # ---- fused Q/K/V projection (attention scale pre-folded into Q) ----
        qkv = jnp.dot(hn, wqkv, preferred_element_type=jnp.float32) + bqkv

        # ---- attention: static loop over batch (scores must not mix batches),
        #      per-head contexts kept in vregs, no VMEM scratch round-trip ----
        ctx_parts = []
        for b in range(B):
            tok = slice(b * S, (b + 1) * S)
            head_ctx = []
            for head in range(NUM_HEADS):
                lo = head * HEAD_DIM
                q_h = qkv[tok, lo:lo + HEAD_DIM]                    # (S, d), scaled
                k_h = qkv[tok, H + lo:H + lo + HEAD_DIM]            # (S, d)
                v_h = qkv[tok, 2 * H + lo:2 * H + lo + HEAD_DIM]    # (S, d)
                scores = jax.lax.dot_general(
                    q_h, k_h, (((1,), (1,)), ((), ())),
                    preferred_element_type=jnp.float32)             # (S, S)
                scores = scores - jnp.max(scores, axis=-1, keepdims=True)
                e = jnp.exp(scores)
                inv = pl.reciprocal(jnp.sum(e, axis=-1, keepdims=True), approx=True)
                head_ctx.append(jnp.dot(e * inv, v_h,
                                        preferred_element_type=jnp.float32))
            ctx_parts.append(jnp.concatenate(head_ctx, axis=-1))    # (S, H)
        ctx = jnp.concatenate(ctx_parts, axis=0)                    # (M, H)

        # ---- ViTSelfOutput dense + first residual ----
        attn_out = jnp.dot(ctx, wo, preferred_element_type=jnp.float32) + bo
        h = attn_out + h

        # ---- layernorm_after + MLP (tanh GELU -> EUP) + second residual ----
        h2 = _layernorm(h, ln2_g, ln2_b)
        inter = jnp.dot(h2, wi, preferred_element_type=jnp.float32) + bi
        inter = jax.nn.gelu(inter, approximate=True)   # tradeoff vs HF exact GELU (~1e-3)
        h = jnp.dot(inter, wf, preferred_element_type=jnp.float32) + bf + h

    out_ref[...] = h


@jax.jit
def vit_encoder(x, packed):
    """ViTEncoder.forward (eval, no head_mask): last_hidden_state. x: (B, S, H)."""
    wqkv, wo, wi, wf, vecs = packed
    out2d = pl.pallas_call(
        vit_encoder_kernel,
        out_shape=jax.ShapeDtypeStruct((M, H), jnp.float32),
        # No grid: a single program with every operand fully VMEM-resident
        # (default whole-array BlockSpecs).  Total footprint is ~0.4 MB.
    )(x.reshape(M, H), wqkv, wo, wi, wf, vecs)
    return out2d.reshape(B, S, H)


# ----------------------- parameters (PyTorch-equivalent) -----------------------

def init_layer_params(key):
    """Per-layer params; linear weights stored pre-transposed as (in, out)."""
    ks = jax.random.split(key, 16)
    std = 0.02
    f32 = jnp.float32

    def vec(k, n, loc=0.0, scale=std):
        return loc + scale * jax.random.normal(k, (1, n), f32)

    return {
        "ln1_g": vec(ks[0], H, loc=1.0, scale=0.05), "ln1_b": vec(ks[1], H, scale=0.05),
        "wq": std * jax.random.normal(ks[2], (H, H), f32), "bq": vec(ks[3], H),
        "wk": std * jax.random.normal(ks[4], (H, H), f32), "bk": vec(ks[5], H),
        "wv": std * jax.random.normal(ks[6], (H, H), f32), "bv": vec(ks[7], H),
        "wo": std * jax.random.normal(ks[8], (H, H), f32), "bo": vec(ks[9], H),
        "ln2_g": vec(ks[10], H, loc=1.0, scale=0.05), "ln2_b": vec(ks[11], H, scale=0.05),
        "wi": std * jax.random.normal(ks[12], (H, INTER), f32), "bi": vec(ks[13], INTER),
        "wf": std * jax.random.normal(ks[14], (INTER, H), f32), "bf": vec(ks[15], H),
    }


def pack_params(layer_params):
    """Pack per-layer params into 5 layer-stacked slabs.

    * 1/sqrt(head_dim) is folded into the Q weights/bias.
    * Bias/LN rows are lane-padded to VEC_W and pre-broadcast to all M tokens,
      so the kernel loads them already token-broadcast (no in-kernel replication).
    """
    scale = 1.0 / math.sqrt(HEAD_DIM)

    def brow(v):
        v = v.reshape(1, -1)
        v = jnp.pad(v, ((0, 0), (0, VEC_W - v.shape[1])))
        return jnp.broadcast_to(v, (M, VEC_W))

    wqkv_l, wo_l, wi_l, wf_l, vec_rows = [], [], [], [], []
    for p in layer_params:
        wqkv_l.append(jnp.concatenate([p["wq"] * scale, p["wk"], p["wv"]], axis=1))
        wo_l.append(p["wo"])
        wi_l.append(p["wi"])
        wf_l.append(p["wf"])
        bqkv = jnp.concatenate([p["bq"] * scale, p["bk"], p["bv"]], axis=1)
        for v in (bqkv, p["bo"], p["bi"], p["bf"],
                  p["ln1_g"], p["ln1_b"], p["ln2_g"], p["ln2_b"]):
            vec_rows.append(brow(v))
    return (jnp.stack(wqkv_l), jnp.stack(wo_l), jnp.stack(wi_l),
            jnp.stack(wf_l), jnp.stack(vec_rows))


# ----------------------------- pure-JAX reference ------------------------------

def _ref_layer(x, p):
    def ln(y, g, b):
        mu = y.mean(-1, keepdims=True)
        var = ((y - mu) ** 2).mean(-1, keepdims=True)
        return (y - mu) * jax.lax.rsqrt(var + LN_EPS) * g + b

    b_, s_, _ = x.shape
    hn = ln(x, p["ln1_g"], p["ln1_b"])
    q = hn @ p["wq"] + p["bq"]
    k = hn @ p["wk"] + p["bk"]
    v = hn @ p["wv"] + p["bv"]

    def split(t):
        return t.reshape(b_, s_, NUM_HEADS, HEAD_DIM).transpose(0, 2, 1, 3)

    qh, kh, vh = split(q), split(k), split(v)
    scores = jnp.einsum("bhqd,bhkd->bhqk", qh, kh) / math.sqrt(HEAD_DIM)
    probs = jax.nn.softmax(scores, axis=-1)
    ctx = jnp.einsum("bhqk,bhkd->bhqd", probs, vh).transpose(0, 2, 1, 3).reshape(b_, s_, H)
    attn = ctx @ p["wo"] + p["bo"]
    h1 = attn + x
    h2 = ln(h1, p["ln2_g"], p["ln2_b"])
    inter = jax.nn.gelu(h2 @ p["wi"] + p["bi"], approximate=False)  # HF exact GELU
    return inter @ p["wf"] + p["bf"] + h1


def vit_encoder_ref(x, layer_params):
    h = x
    for p in layer_params:
        h = _ref_layer(h, p)
    return h


if __name__ == "__main__":
    root = jax.random.PRNGKey(0)
    x_key, *layer_keys = jax.random.split(root, NUM_LAYERS + 1)
    hidden_states = jax.random.normal(x_key, (B, S, H), jnp.float32)
    layer_params = tuple(init_layer_params(k) for k in layer_keys)
    packed = pack_params(layer_params)

    out = vit_encoder(hidden_states, packed)
    jax.block_until_ready(out)
    assert out.shape == (B, S, H)

    ref = vit_encoder_ref(hidden_states, layer_params)
    err = float(jnp.max(jnp.abs(out - ref)))
    # Tolerance covers approx-reciprocal softmax denom + tanh-GELU deviations.
    assert err < 3e-2, f"max abs error vs reference too large: {err}"

    print("KERNEL_OK")
</pallas_src>

<mosaic_0001>
module attributes {stable_mosaic.version = 11 : i64} {
  func.func @vit_encoder_kernel(%arg0: memref<16x32xf32, #tpu.memory_space<vmem>>, %arg1: memref<2x32x96xf32, #tpu.memory_space<vmem>>, %arg2: memref<2x32x32xf32, #tpu.memory_space<vmem>>, %arg3: memref<2x32x64xf32, #tpu.memory_space<vmem>>, %arg4: memref<2x64x32xf32, #tpu.memory_space<vmem>>, %arg5: memref<16x16x96xf32, #tpu.memory_space<vmem>>, %arg6: memref<16x32xf32, #tpu.memory_space<vmem>>) attributes {dimension_semantics = [], scalar_prefetch = 0 : i64, scratch_operands = 0 : i64, tpu.core_type = #tpu.core_type<tc>} {
    %c0 = arith.constant 0 : index
    %c0_0 = arith.constant 0 : index
    %0 = vector.load %arg0[%c0, %c0_0] : memref<16x32xf32, #tpu.memory_space<vmem>>, vector<16x32xf32>
    %c0_1 = arith.constant 0 : index
    %c0_2 = arith.constant 0 : index
    %c0_3 = arith.constant 0 : index
    %1 = vector.load %arg1[%c0_1, %c0_2, %c0_3] : memref<2x32x96xf32, #tpu.memory_space<vmem>>, vector<1x32x96xf32>
    %2 = vector.shape_cast %1 : vector<1x32x96xf32> to vector<32x96xf32>
    %c0_4 = arith.constant 0 : index
    %c0_5 = arith.constant 0 : index
    %c0_6 = arith.constant 0 : index
    %3 = vector.load %arg2[%c0_4, %c0_5, %c0_6] : memref<2x32x32xf32, #tpu.memory_space<vmem>>, vector<1x32x32xf32>
    %4 = vector.shape_cast %3 : vector<1x32x32xf32> to vector<32x32xf32>
    %c0_7 = arith.constant 0 : index
    %c0_8 = arith.constant 0 : index
    %c0_9 = arith.constant 0 : index
    %5 = vector.load %arg3[%c0_7, %c0_8, %c0_9] : memref<2x32x64xf32, #tpu.memory_space<vmem>>, vector<1x32x64xf32>
    %6 = vector.shape_cast %5 : vector<1x32x64xf32> to vector<32x64xf32>
    %c0_10 = arith.constant 0 : index
    %c0_11 = arith.constant 0 : index
    %c0_12 = arith.constant 0 : index
    %7 = vector.load %arg4[%c0_10, %c0_11, %c0_12] : memref<2x64x32xf32, #tpu.memory_space<vmem>>, vector<1x64x32xf32>
    %8 = vector.shape_cast %7 : vector<1x64x32xf32> to vector<64x32xf32>
    %c0_13 = arith.constant 0 : index
    %c0_14 = arith.constant 0 : index
    %c0_15 = arith.constant 0 : index
    %9 = vector.load %arg5[%c0_13, %c0_14, %c0_15] : memref<16x16x96xf32, #tpu.memory_space<vmem>>, vector<1x16x96xf32>
    %10 = vector.shape_cast %9 : vector<1x16x96xf32> to vector<16x96xf32>
    %c1 = arith.constant 1 : index
    %c0_16 = arith.constant 0 : index
    %c0_17 = arith.constant 0 : index
    %11 = vector.load %arg5[%c1, %c0_16, %c0_17] : memref<16x16x96xf32, #tpu.memory_space<vmem>>, vector<1x16x96xf32>
    %12 = vector.shape_cast %11 : vector<1x16x96xf32> to vector<16x96xf32>
    %13 = vector.extract_strided_slice %12 {offsets = [0, 0], sizes = [16, 32], strides = [1, 1]} : vector<16x96xf32> to vector<16x32xf32>
    %c2 = arith.constant 2 : index
    %c0_18 = arith.constant 0 : index
    %c0_19 = arith.constant 0 : index
    %14 = vector.load %arg5[%c2, %c0_18, %c0_19] : memref<16x16x96xf32, #tpu.memory_space<vmem>>, vector<1x16x96xf32>
    %15 = vector.shape_cast %14 : vector<1x16x96xf32> to vector<16x96xf32>
    %16 = vector.extract_strided_slice %15 {offsets = [0, 0], sizes = [16, 64], strides = [1, 1]} : vector<16x96xf32> to vector<16x64xf32>
    %c3 = arith.constant 3 : index
    %c0_20 = arith.constant 0 : index
    %c0_21 = arith.constant 0 : index
    %17 = vector.load %arg5[%c3, %c0_20, %c0_21] : memref<16x16x96xf32, #tpu.memory_space<vmem>>, vector<1x16x96xf32>
    %18 = vector.shape_cast %17 : vector<1x16x96xf32> to vector<16x96xf32>
    %19 = vector.extract_strided_slice %18 {offsets = [0, 0], sizes = [16, 32], strides = [1, 1]} : vector<16x96xf32> to vector<16x32xf32>
    %c4 = arith.constant 4 : index
    %c0_22 = arith.constant 0 : index
    %c0_23 = arith.constant 0 : index
    %20 = vector.load %arg5[%c4, %c0_22, %c0_23] : memref<16x16x96xf32, #tpu.memory_space<vmem>>, vector<1x16x96xf32>
    %21 = vector.shape_cast %20 : vector<1x16x96xf32> to vector<16x96xf32>
    %22 = vector.extract_strided_slice %21 {offsets = [0, 0], sizes = [16, 32], strides = [1, 1]} : vector<16x96xf32> to vector<16x32xf32>
    %c5 = arith.constant 5 : index
    %c0_24 = arith.constant 0 : index
    %c0_25 = arith.constant 0 : index
    %23 = vector.load %arg5[%c5, %c0_24, %c0_25] : memref<16x16x96xf32, #tpu.memory_space<vmem>>, vector<1x16x96xf32>
    %24 = vector.shape_cast %23 : vector<1x16x96xf32> to vector<16x96xf32>
    %25 = vector.extract_strided_slice %24 {offsets = [0, 0], sizes = [16, 32], strides = [1, 1]} : vector<16x96xf32> to vector<16x32xf32>
    %c6 = arith.constant 6 : index
    %c0_26 = arith.constant 0 : index
    %c0_27 = arith.constant 0 : index
    %26 = vector.load %arg5[%c6, %c0_26, %c0_27] : memref<16x16x96xf32, #tpu.memory_space<vmem>>, vector<1x16x96xf32>
    %27 = vector.shape_cast %26 : vector<1x16x96xf32> to vector<16x96xf32>
    %28 = vector.extract_strided_slice %27 {offsets = [0, 0], sizes = [16, 32], strides = [1, 1]} : vector<16x96xf32> to vector<16x32xf32>
    %c7 = arith.constant 7 : index
    %c0_28 = arith.constant 0 : index
    %c0_29 = arith.constant 0 : index
    %29 = vector.load %arg5[%c7, %c0_28, %c0_29] : memref<16x16x96xf32, #tpu.memory_space<vmem>>, vector<1x16x96xf32>
    %30 = vector.shape_cast %29 : vector<1x16x96xf32> to vector<16x96xf32>
    %31 = vector.extract_strided_slice %30 {offsets = [0, 0], sizes = [16, 32], strides = [1, 1]} : vector<16x96xf32> to vector<16x32xf32>
    %cst = arith.constant dense<0.000000e+00> : vector<16xf32>
    %32 = vector.multi_reduction <add>, %0, %cst [1] : vector<16x32xf32> to vector<16xf32>
    %33 = vector.shape_cast %32 : vector<16xf32> to vector<16x1xf32>
    %cst_30 = arith.constant 3.200000e+01 : f32
    %34 = vector.broadcast %cst_30 : f32 to vector<16x1xf32>
    %35 = arith.divf %33, %34 : vector<16x1xf32>
    %36 = vector.broadcast %35 : vector<16x1xf32> to vector<16x32xf32>
    %37 = arith.subf %0, %36 : vector<16x32xf32>
    %38 = arith.mulf %37, %37 : vector<16x32xf32>
    %cst_31 = arith.constant dense<0.000000e+00> : vector<16xf32>
    %39 = vector.multi_reduction <add>, %38, %cst_31 [1] : vector<16x32xf32> to vector<16xf32>
    %40 = vector.shape_cast %39 : vector<16xf32> to vector<16x1xf32>
    %cst_32 = arith.constant 3.200000e+01 : f32
    %41 = vector.broadcast %cst_32 : f32 to vector<16x1xf32>
    %42 = arith.divf %40, %41 : vector<16x1xf32>
    %cst_33 = arith.constant 9.99999996E-13 : f32
    %43 = vector.broadcast %cst_33 : f32 to vector<16x1xf32>
    %44 = arith.addf %42, %43 : vector<16x1xf32>
    %45 = math.rsqrt %44 : vector<16x1xf32>
    %46 = vector.broadcast %45 : vector<16x1xf32> to vector<16x32xf32>
    %47 = arith.mulf %37, %46 : vector<16x32xf32>
    %48 = arith.mulf %47, %22 : vector<16x32xf32>
    %49 = arith.addf %48, %25 : vector<16x32xf32>
    %cst_34 = arith.constant dense<0.000000e+00> : vector<16x96xf32>
    %50 = tpu.matmul %49, %2, %cst_34 {dimension_numbers = #tpu.dot_dimension_numbers<[1], [0], [0], [1], [0, 0, 1, 1], [], []>} : vector<16x32xf32>, vector<32x96xf32>, vector<16x96xf32> -> vector<16x96xf32>
    %51 = arith.addf %50, %10 : vector<16x96xf32>
    %52 = vector.extract_strided_slice %51 {offsets = [0, 0], sizes = [8, 16], strides = [1, 1]} : vector<16x96xf32> to vector<8x16xf32>
    %53 = vector.extract_strided_slice %51 {offsets = [0, 32], sizes = [8, 16], strides = [1, 1]} : vector<16x96xf32> to vector<8x16xf32>
    %54 = vector.extract_strided_slice %51 {offsets = [0, 64], sizes = [8, 16], strides = [1, 1]} : vector<16x96xf32> to vector<8x16xf32>
    %cst_35 = arith.constant dense<0.000000e+00> : vector<8x8xf32>
    %55 = tpu.matmul %52, %53, %cst_35 {dimension_numbers = #tpu.dot_dimension_numbers<[1], [1], [0], [0], [0, 0, 1, 0], [], []>} : vector<8x16xf32>, vector<8x16xf32>, vector<8x8xf32> -> vector<8x8xf32>
    %cst_36 = arith.constant dense<0xFF800000> : vector<8xf32>
    %56 = vector.multi_reduction <maximumf>, %55, %cst_36 [1] : vector<8x8xf32> to vector<8xf32>
    %57 = vector.shape_cast %56 : vector<8xf32> to vector<8x1xf32>
    %58 = vector.broadcast %57 : vector<8x1xf32> to vector<8x8xf32>
    %59 = arith.subf %55, %58 : vector<8x8xf32>
    %60 = math.exp %59 : vector<8x8xf32>
    %cst_37 = arith.constant dense<0.000000e+00> : vector<8xf32>
    %61 = vector.multi_reduction <add>, %60, %cst_37 [1] : vector<8x8xf32> to vector<8xf32>
    %62 = vector.shape_cast %61 : vector<8xf32> to vector<8x1xf32>
    %63 = tpu.reciprocal %62 {approx = true} : vector<8x1xf32> -> vector<8x1xf32>
    %64 = vector.broadcast %63 : vector<8x1xf32> to vector<8x8xf32>
    %65 = arith.mulf %60, %64 : vector<8x8xf32>
    %cst_38 = arith.constant dense<0.000000e+00> : vector<8x16xf32>
    %66 = tpu.matmul %65, %54, %cst_38 {dimension_numbers = #tpu.dot_dimension_numbers<[1], [0], [0], [1], [0, 0, 1, 1], [], []>} : vector<8x8xf32>, vector<8x16xf32>, vector<8x16xf32> -> vector<8x16xf32>
    %67 = vector.extract_strided_slice %51 {offsets = [0, 16], sizes = [8, 16], strides = [1, 1]} : vector<16x96xf32> to vector<8x16xf32>
    %68 = vector.extract_strided_slice %51 {offsets = [0, 48], sizes = [8, 16], strides = [1, 1]} : vector<16x96xf32> to vector<8x16xf32>
    %69 = vector.extract_strided_slice %51 {offsets = [0, 80], sizes = [8, 16], strides = [1, 1]} : vector<16x96xf32> to vector<8x16xf32>
    %cst_39 = arith.constant dense<0.000000e+00> : vector<8x8xf32>
    %70 = tpu.matmul %67, %68, %cst_39 {dimension_numbers = #tpu.dot_dimension_numbers<[1], [1], [0], [0], [0, 0, 1, 0], [], []>} : vector<8x16xf32>, vector<8x16xf32>, vector<8x8xf32> -> vector<8x8xf32>
    %cst_40 = arith.constant dense<0xFF800000> : vector<8xf32>
    %71 = vector.multi_reduction <maximumf>, %70, %cst_40 [1] : vector<8x8xf32> to vector<8xf32>
    %72 = vector.shape_cast %71 : vector<8xf32> to vector<8x1xf32>
    %73 = vector.broadcast %72 : vector<8x1xf32> to vector<8x8xf32>
    %74 = arith.subf %70, %73 : vector<8x8xf32>
    %75 = math.exp %74 : vector<8x8xf32>
    %cst_41 = arith.constant dense<0.000000e+00> : vector<8xf32>
    %76 = vector.multi_reduction <add>, %75, %cst_41 [1] : vector<8x8xf32> to vector<8xf32>
    %77 = vector.shape_cast %76 : vector<8xf32> to vector<8x1xf32>
    %78 = tpu.reciprocal %77 {approx = true} : vector<8x1xf32> -> vector<8x1xf32>
    %79 = vector.broadcast %78 : vector<8x1xf32> to vector<8x8xf32>
    %80 = arith.mulf %75, %79 : vector<8x8xf32>
    %cst_42 = arith.constant dense<0.000000e+00> : vector<8x16xf32>
    %81 = tpu.matmul %80, %69, %cst_42 {dimension_numbers = #tpu.dot_dimension_numbers<[1], [0], [0], [1], [0, 0, 1, 1], [], []>} : vector<8x8xf32>, vector<8x16xf32>, vector<8x16xf32> -> vector<8x16xf32>
    %82 = tpu.concatenate %66, %81 in 1 : vector<8x16xf32>, vector<8x16xf32> -> vector<8x32xf32>
    %83 = vector.extract_strided_slice %51 {offsets = [8, 0], sizes = [8, 16], strides = [1, 1]} : vector<16x96xf32> to vector<8x16xf32>
    %84 = vector.extract_strided_slice %51 {offsets = [8, 32], sizes = [8, 16], strides = [1, 1]} : vector<16x96xf32> to vector<8x16xf32>
    %85 = vector.extract_strided_slice %51 {offsets = [8, 64], sizes = [8, 16], strides = [1, 1]} : vector<16x96xf32> to vector<8x16xf32>
    %cst_43 = arith.constant dense<0.000000e+00> : vector<8x8xf32>
    %86 = tpu.matmul %83, %84, %cst_43 {dimension_numbers = #tpu.dot_dimension_numbers<[1], [1], [0], [0], [0, 0, 1, 0], [], []>} : vector<8x16xf32>, vector<8x16xf32>, vector<8x8xf32> -> vector<8x8xf32>
    %cst_44 = arith.constant dense<0xFF800000> : vector<8xf32>
    %87 = vector.multi_reduction <maximumf>, %86, %cst_44 [1] : vector<8x8xf32> to vector<8xf32>
    %88 = vector.shape_cast %87 : vector<8xf32> to vector<8x1xf32>
    %89 = vector.broadcast %88 : vector<8x1xf32> to vector<8x8xf32>
    %90 = arith.subf %86, %89 : vector<8x8xf32>
    %91 = math.exp %90 : vector<8x8xf32>
    %cst_45 = arith.constant dense<0.000000e+00> : vector<8xf32>
    %92 = vector.multi_reduction <add>, %91, %cst_45 [1] : vector<8x8xf32> to vector<8xf32>
    %93 = vector.shape_cast %92 : vector<8xf32> to vector<8x1xf32>
    %94 = tpu.reciprocal %93 {approx = true} : vector<8x1xf32> -> vector<8x1xf32>
    %95 = vector.broadcast %94 : vector<8x1xf32> to vector<8x8xf32>
    %96 = arith.mulf %91, %95 : vector<8x8xf32>
    %cst_46 = arith.constant dense<0.000000e+00> : vector<8x16xf32>
    %97 = tpu.matmul %96, %85, %cst_46 {dimension_numbers = #tpu.dot_dimension_numbers<[1], [0], [0], [1], [0, 0, 1, 1], [], []>} : vector<8x8xf32>, vector<8x16xf32>, vector<8x16xf32> -> vector<8x16xf32>
    %98 = vector.extract_strided_slice %51 {offsets = [8, 16], sizes = [8, 16], strides = [1, 1]} : vector<16x96xf32> to vector<8x16xf32>
    %99 = vector.extract_strided_slice %51 {offsets = [8, 48], sizes = [8, 16], strides = [1, 1]} : vector<16x96xf32> to vector<8x16xf32>
    %100 = vector.extract_strided_slice %51 {offsets = [8, 80], sizes = [8, 16], strides = [1, 1]} : vector<16x96xf32> to vector<8x16xf32>
    %cst_47 = arith.constant dense<0.000000e+00> : vector<8x8xf32>
    %101 = tpu.matmul %98, %99, %cst_47 {dimension_numbers = #tpu.dot_dimension_numbers<[1], [1], [0], [0], [0, 0, 1, 0], [], []>} : vector<8x16xf32>, vector<8x16xf32>, vector<8x8xf32> -> vector<8x8xf32>
    %cst_48 = arith.constant dense<0xFF800000> : vector<8xf32>
    %102 = vector.multi_reduction <maximumf>, %101, %cst_48 [1] : vector<8x8xf32> to vector<8xf32>
    %103 = vector.shape_cast %102 : vector<8xf32> to vector<8x1xf32>
    %104 = vector.broadcast %103 : vector<8x1xf32> to vector<8x8xf32>
    %105 = arith.subf %101, %104 : vector<8x8xf32>
    %106 = math.exp %105 : vector<8x8xf32>
    %cst_49 = arith.constant dense<0.000000e+00> : vector<8xf32>
    %107 = vector.multi_reduction <add>, %106, %cst_49 [1] : vector<8x8xf32> to vector<8xf32>
    %108 = vector.shape_cast %107 : vector<8xf32> to vector<8x1xf32>
    %109 = tpu.reciprocal %108 {approx = true} : vector<8x1xf32> -> vector<8x1xf32>
    %110 = vector.broadcast %109 : vector<8x1xf32> to vector<8x8xf32>
    %111 = arith.mulf %106, %110 : vector<8x8xf32>
    %cst_50 = arith.constant dense<0.000000e+00> : vector<8x16xf32>
    %112 = tpu.matmul %111, %100, %cst_50 {dimension_numbers = #tpu.dot_dimension_numbers<[1], [0], [0], [1], [0, 0, 1, 1], [], []>} : vector<8x8xf32>, vector<8x16xf32>, vector<8x16xf32> -> vector<8x16xf32>
    %113 = tpu.concatenate %97, %112 in 1 : vector<8x16xf32>, vector<8x16xf32> -> vector<8x32xf32>
    %114 = tpu.concatenate %82, %113 in 0 : vector<8x32xf32>, vector<8x32xf32> -> vector<16x32xf32>
    %cst_51 = arith.constant dense<0.000000e+00> : vector<16x32xf32>
    %115 = tpu.matmul %114, %4, %cst_51 {dimension_numbers = #tpu.dot_dimension_numbers<[1], [0], [0], [1], [0, 0, 1, 1], [], []>} : vector<16x32xf32>, vector<32x32xf32>, vector<16x32xf32> -> vector<16x32xf32>
    %116 = arith.addf %115, %13 : vector<16x32xf32>
    %117 = arith.addf %116, %0 : vector<16x32xf32>
    %cst_52 = arith.constant dense<0.000000e+00> : vector<16xf32>
    %118 = vector.multi_reduction <add>, %117, %cst_52 [1] : vector<16x32xf32> to vector<16xf32>
    %119 = vector.shape_cast %118 : vector<16xf32> to vector<16x1xf32>
    %cst_53 = arith.constant 3.200000e+01 : f32
    %120 = vector.broadcast %cst_53 : f32 to vector<16x1xf32>
    %121 = arith.divf %119, %120 : vector<16x1xf32>
    %122 = vector.broadcast %121 : vector<16x1xf32> to vector<16x32xf32>
    %123 = arith.subf %117, %122 : vector<16x32xf32>
    %124 = arith.mulf %123, %123 : vector<16x32xf32>
    %cst_54 = arith.constant dense<0.000000e+00> : vector<16xf32>
    %125 = vector.multi_reduction <add>, %124, %cst_54 [1] : vector<16x32xf32> to vector<16xf32>
    %126 = vector.shape_cast %125 : vector<16xf32> to vector<16x1xf32>
    %cst_55 = arith.constant 3.200000e+01 : f32
    %127 = vector.broadcast %cst_55 : f32 to vector<16x1xf32>
    %128 = arith.divf %126, %127 : vector<16x1xf32>
    %cst_56 = arith.constant 9.99999996E-13 : f32
    %129 = vector.broadcast %cst_56 : f32 to vector<16x1xf32>
    %130 = arith.addf %128, %129 : vector<16x1xf32>
    %131 = math.rsqrt %130 : vector<16x1xf32>
    %132 = vector.broadcast %131 : vector<16x1xf32> to vector<16x32xf32>
    %133 = arith.mulf %123, %132 : vector<16x32xf32>
    %134 = arith.mulf %133, %28 : vector<16x32xf32>
    %135 = arith.addf %134, %31 : vector<16x32xf32>
    %cst_57 = arith.constant dense<0.000000e+00> : vector<16x64xf32>
    %136 = tpu.matmul %135, %6, %cst_57 {dimension_numbers = #tpu.dot_dimension_numbers<[1], [0], [0], [1], [0, 0, 1, 1], [], []>} : vector<16x32xf32>, vector<32x64xf32>, vector<16x64xf32> -> vector<16x64xf32>
    %137 = arith.addf %136, %16 : vector<16x64xf32>
    %138 = arith.mulf %137, %137 : vector<16x64xf32>
    %139 = arith.mulf %137, %138 : vector<16x64xf32>
    %cst_58 = arith.constant 4.471500e-02 : f32
    %140 = vector.broadcast %cst_58 : f32 to vector<16x64xf32>
    %141 = arith.mulf %140, %139 : vector<16x64xf32>
    %142 = arith.addf %137, %141 : vector<16x64xf32>
    %cst_59 = arith.constant 0.797884583 : f32
    %143 = vector.broadcast %cst_59 : f32 to vector<16x64xf32>
    %144 = arith.mulf %143, %142 : vector<16x64xf32>
    %145 = math.tanh %144 : vector<16x64xf32>
    %cst_60 = arith.constant 1.000000e+00 : f32
    %146 = vector.broadcast %cst_60 : f32 to vector<16x64xf32>
    %147 = arith.addf %146, %145 : vector<16x64xf32>
    %cst_61 = arith.constant 5.000000e-01 : f32
    %148 = vector.broadcast %cst_61 : f32 to vector<16x64xf32>
    %149 = arith.mulf %148, %147 : vector<16x64xf32>
    %150 = arith.mulf %137, %149 : vector<16x64xf32>
    %cst_62 = arith.constant dense<0.000000e+00> : vector<16x32xf32>
    %151 = tpu.matmul %150, %8, %cst_62 {dimension_numbers = #tpu.dot_dimension_numbers<[1], [0], [0], [1], [0, 0, 1, 1], [], []>} : vector<16x64xf32>, vector<64x32xf32>, vector<16x32xf32> -> vector<16x32xf32>
    %152 = arith.addf %151, %19 : vector<16x32xf32>
    %153 = arith.addf %152, %117 : vector<16x32xf32>
    %c1_63 = arith.constant 1 : index
    %c0_64 = arith.constant 0 : index
    %c0_65 = arith.constant 0 : index
    %154 = vector.load %arg1[%c1_63, %c0_64, %c0_65] : memref<2x32x96xf32, #tpu.memory_space<vmem>>, vector<1x32x96xf32>
    %155 = vector.shape_cast %154 : vector<1x32x96xf32> to vector<32x96xf32>
    %c1_66 = arith.constant 1 : index
    %c0_67 = arith.constant 0 : index
    %c0_68 = arith.constant 0 : index
    %156 = vector.load %arg2[%c1_66, %c0_67, %c0_68] : memref<2x32x32xf32, #tpu.memory_space<vmem>>, vector<1x32x32xf32>
    %157 = vector.shape_cast %156 : vector<1x32x32xf32> to vector<32x32xf32>
    %c1_69 = arith.constant 1 : index
    %c0_70 = arith.constant 0 : index
    %c0_71 = arith.constant 0 : index
    %158 = vector.load %arg3[%c1_69, %c0_70, %c0_71] : memref<2x32x64xf32, #tpu.memory_space<vmem>>, vector<1x32x64xf32>
    %159 = vector.shape_cast %158 : vector<1x32x64xf32> to vector<32x64xf32>
    %c1_72 = arith.constant 1 : index
    %c0_73 = arith.constant 0 : index
    %c0_74 = arith.constant 0 : index
    %160 = vector.load %arg4[%c1_72, %c0_73, %c0_74] : memref<2x64x32xf32, #tpu.memory_space<vmem>>, vector<1x64x32xf32>
    %161 = vector.shape_cast %160 : vector<1x64x32xf32> to vector<64x32xf32>
    %c8 = arith.constant 8 : index
    %c0_75 = arith.constant 0 : index
    %c0_76 = arith.constant 0 : index
    %162 = vector.load %arg5[%c8, %c0_75, %c0_76] : memref<16x16x96xf32, #tpu.memory_space<vmem>>, vector<1x16x96xf32>
    %163 = vector.shape_cast %162 : vector<1x16x96xf32> to vector<16x96xf32>
    %c9 = arith.constant 9 : index
    %c0_77 = arith.constant 0 : index
    %c0_78 = arith.constant 0 : index
    %164 = vector.load %arg5[%c9, %c0_77, %c0_78] : memref<16x16x96xf32, #tpu.memory_space<vmem>>, vector<1x16x96xf32>
    %165 = vector.shape_cast %164 : vector<1x16x96xf32> to vector<16x96xf32>
    %166 = vector.extract_strided_slice %165 {offsets = [0, 0], sizes = [16, 32], strides = [1, 1]} : vector<16x96xf32> to vector<16x32xf32>
    %c10 = arith.constant 10 : index
    %c0_79 = arith.constant 0 : index
    %c0_80 = arith.constant 0 : index
    %167 = vector.load %arg5[%c10, %c0_79, %c0_80] : memref<16x16x96xf32, #tpu.memory_space<vmem>>, vector<1x16x96xf32>
    %168 = vector.shape_cast %167 : vector<1x16x96xf32> to vector<16x96xf32>
    %169 = vector.extract_strided_slice %168 {offsets = [0, 0], sizes = [16, 64], strides = [1, 1]} : vector<16x96xf32> to vector<16x64xf32>
    %c11 = arith.constant 11 : index
    %c0_81 = arith.constant 0 : index
    %c0_82 = arith.constant 0 : index
    %170 = vector.load %arg5[%c11, %c0_81, %c0_82] : memref<16x16x96xf32, #tpu.memory_space<vmem>>, vector<1x16x96xf32>
    %171 = vector.shape_cast %170 : vector<1x16x96xf32> to vector<16x96xf32>
    %172 = vector.extract_strided_slice %171 {offsets = [0, 0], sizes = [16, 32], strides = [1, 1]} : vector<16x96xf32> to vector<16x32xf32>
    %c12 = arith.constant 12 : index
    %c0_83 = arith.constant 0 : index
    %c0_84 = arith.constant 0 : index
    %173 = vector.load %arg5[%c12, %c0_83, %c0_84] : memref<16x16x96xf32, #tpu.memory_space<vmem>>, vector<1x16x96xf32>
    %174 = vector.shape_cast %173 : vector<1x16x96xf32> to vector<16x96xf32>
    %175 = vector.extract_strided_slice %174 {offsets = [0, 0], sizes = [16, 32], strides = [1, 1]} : vector<16x96xf32> to vector<16x32xf32>
    %c13 = arith.constant 13 : index
    %c0_85 = arith.constant 0 : index
    %c0_86 = arith.constant 0 : index
    %176 = vector.load %arg5[%c13, %c0_85, %c0_86] : memref<16x16x96xf32, #tpu.memory_space<vmem>>, vector<1x16x96xf32>
    %177 = vector.shape_cast %176 : vector<1x16x96xf32> to vector<16x96xf32>
    %178 = vector.extract_strided_slice %177 {offsets = [0, 0], sizes = [16, 32], strides = [1, 1]} : vector<16x96xf32> to vector<16x32xf32>
    %c14 = arith.constant 14 : index
    %c0_87 = arith.constant 0 : index
    %c0_88 = arith.constant 0 : index
    %179 = vector.load %arg5[%c14, %c0_87, %c0_88] : memref<16x16x96xf32, #tpu.memory_space<vmem>>, vector<1x16x96xf32>
    %180 = vector.shape_cast %179 : vector<1x16x96xf32> to vector<16x96xf32>
    %181 = vector.extract_strided_slice %180 {offsets = [0, 0], sizes = [16, 32], strides = [1, 1]} : vector<16x96xf32> to vector<16x32xf32>
    %c15 = arith.constant 15 : index
    %c0_89 = arith.constant 0 : index
    %c0_90 = arith.constant 0 : index
    %182 = vector.load %arg5[%c15, %c0_89, %c0_90] : memref<16x16x96xf32, #tpu.memory_space<vmem>>, vector<1x16x96xf32>
    %183 = vector.shape_cast %182 : vector<1x16x96xf32> to vector<16x96xf32>
    %184 = vector.extract_strided_slice %183 {offsets = [0, 0], sizes = [16, 32], strides = [1, 1]} : vector<16x96xf32> to vector<16x32xf32>
    %cst_91 = arith.constant dense<0.000000e+00> : vector<16xf32>
    %185 = vector.multi_reduction <add>, %153, %cst_91 [1] : vector<16x32xf32> to vector<16xf32>
    %186 = vector.shape_cast %185 : vector<16xf32> to vector<16x1xf32>
    %cst_92 = arith.constant 3.200000e+01 : f32
    %187 = vector.broadcast %cst_92 : f32 to vector<16x1xf32>
    %188 = arith.divf %186, %187 : vector<16x1xf32>
    %189 = vector.broadcast %188 : vector<16x1xf32> to vector<16x32xf32>
    %190 = arith.subf %153, %189 : vector<16x32xf32>
    %191 = arith.mulf %190, %190 : vector<16x32xf32>
    %cst_93 = arith.constant dense<0.000000e+00> : vector<16xf32>
    %192 = vector.multi_reduction <add>, %191, %cst_93 [1] : vector<16x32xf32> to vector<16xf32>
    %193 = vector.shape_cast %192 : vector<16xf32> to vector<16x1xf32>
    %cst_94 = arith.constant 3.200000e+01 : f32
    %194 = vector.broadcast %cst_94 : f32 to vector<16x1xf32>
    %195 = arith.divf %193, %194 : vector<16x1xf32>
    %cst_95 = arith.constant 9.99999996E-13 : f32
    %196 = vector.broadcast %cst_95 : f32 to vector<16x1xf32>
    %197 = arith.addf %195, %196 : vector<16x1xf32>
    %198 = math.rsqrt %197 : vector<16x1xf32>
    %199 = vector.broadcast %198 : vector<16x1xf32> to vector<16x32xf32>
    %200 = arith.mulf %190, %199 : vector<16x32xf32>
    %201 = arith.mulf %200, %175 : vector<16x32xf32>
    %202 = arith.addf %201, %178 : vector<16x32xf32>
    %cst_96 = arith.constant dense<0.000000e+00> : vector<16x96xf32>
    %203 = tpu.matmul %202, %155, %cst_96 {dimension_numbers = #tpu.dot_dimension_numbers<[1], [0], [0], [1], [0, 0, 1, 1], [], []>} : vector<16x32xf32>, vector<32x96xf32>, vector<16x96xf32> -> vector<16x96xf32>
    %204 = arith.addf %203, %163 : vector<16x96xf32>
    %205 = vector.extract_strided_slice %204 {offsets = [0, 0], sizes = [8, 16], strides = [1, 1]} : vector<16x96xf32> to vector<8x16xf32>
    %206 = vector.extract_strided_slice %204 {offsets = [0, 32], sizes = [8, 16], strides = [1, 1]} : vector<16x96xf32> to vector<8x16xf32>
    %207 = vector.extract_strided_slice %204 {offsets = [0, 64], sizes = [8, 16], strides = [1, 1]} : vector<16x96xf32> to vector<8x16xf32>
    %cst_97 = arith.constant dense<0.000000e+00> : vector<8x8xf32>
    %208 = tpu.matmul %205, %206, %cst_97 {dimension_numbers = #tpu.dot_dimension_numbers<[1], [1], [0], [0], [0, 0, 1, 0], [], []>} : vector<8x16xf32>, vector<8x16xf32>, vector<8x8xf32> -> vector<8x8xf32>
    %cst_98 = arith.constant dense<0xFF800000> : vector<8xf32>
    %209 = vector.multi_reduction <maximumf>, %208, %cst_98 [1] : vector<8x8xf32> to vector<8xf32>
    %210 = vector.shape_cast %209 : vector<8xf32> to vector<8x1xf32>
    %211 = vector.broadcast %210 : vector<8x1xf32> to vector<8x8xf32>
    %212 = arith.subf %208, %211 : vector<8x8xf32>
    %213 = math.exp %212 : vector<8x8xf32>
    %cst_99 = arith.constant dense<0.000000e+00> : vector<8xf32>
    %214 = vector.multi_reduction <add>, %213, %cst_99 [1] : vector<8x8xf32> to vector<8xf32>
    %215 = vector.shape_cast %214 : vector<8xf32> to vector<8x1xf32>
    %216 = tpu.reciprocal %215 {approx = true} : vector<8x1xf32> -> vector<8x1xf32>
    %217 = vector.broadcast %216 : vector<8x1xf32> to vector<8x8xf32>
    %218 = arith.mulf %213, %217 : vector<8x8xf32>
    %cst_100 = arith.constant dense<0.000000e+00> : vector<8x16xf32>
    %219 = tpu.matmul %218, %207, %cst_100 {dimension_numbers = #tpu.dot_dimension_numbers<[1], [0], [0], [1], [0, 0, 1, 1], [], []>} : vector<8x8xf32>, vector<8x16xf32>, vector<8x16xf32> -> vector<8x16xf32>
    %220 = vector.extract_strided_slice %204 {offsets = [0, 16], sizes = [8, 16], strides = [1, 1]} : vector<16x96xf32> to vector<8x16xf32>
    %221 = vector.extract_strided_slice %204 {offsets = [0, 48], sizes = [8, 16], strides = [1, 1]} : vector<16x96xf32> to vector<8x16xf32>
    %222 = vector.extract_strided_slice %204 {offsets = [0, 80], sizes = [8, 16], strides = [1, 1]} : vector<16x96xf32> to vector<8x16xf32>
    %cst_101 = arith.constant dense<0.000000e+00> : vector<8x8xf32>
    %223 = tpu.matmul %220, %221, %cst_101 {dimension_numbers = #tpu.dot_dimension_numbers<[1], [1], [0], [0], [0, 0, 1, 0], [], []>} : vector<8x16xf32>, vector<8x16xf32>, vector<8x8xf32> -> vector<8x8xf32>
    %cst_102 = arith.constant dense<0xFF800000> : vector<8xf32>
    %224 = vector.multi_reduction <maximumf>, %223, %cst_102 [1] : vector<8x8xf32> to vector<8xf32>
    %225 = vector.shape_cast %224 : vector<8xf32> to vector<8x1xf32>
    %226 = vector.broadcast %225 : vector<8x1xf32> to vector<8x8xf32>
    %227 = arith.subf %223, %226 : vector<8x8xf32>
    %228 = math.exp %227 : vector<8x8xf32>
    %cst_103 = arith.constant dense<0.000000e+00> : vector<8xf32>
    %229 = vector.multi_reduction <add>, %228, %cst_103 [1] : vector<8x8xf32> to vector<8xf32>
    %230 = vector.shape_cast %229 : vector<8xf32> to vector<8x1xf32>
    %231 = tpu.reciprocal %230 {approx = true} : vector<8x1xf32> -> vector<8x1xf32>
    %232 = vector.broadcast %231 : vector<8x1xf32> to vector<8x8xf32>
    %233 = arith.mulf %228, %232 : vector<8x8xf32>
    %cst_104 = arith.constant dense<0.000000e+00> : vector<8x16xf32>
    %234 = tpu.matmul %233, %222, %cst_104 {dimension_numbers = #tpu.dot_dimension_numbers<[1], [0], [0], [1], [0, 0, 1, 1], [], []>} : vector<8x8xf32>, vector<8x16xf32>, vector<8x16xf32> -> vector<8x16xf32>
    %235 = tpu.concatenate %219, %234 in 1 : vector<8x16xf32>, vector<8x16xf32> -> vector<8x32xf32>
    %236 = vector.extract_strided_slice %204 {offsets = [8, 0], sizes = [8, 16], strides = [1, 1]} : vector<16x96xf32> to vector<8x16xf32>
    %237 = vector.extract_strided_slice %204 {offsets = [8, 32], sizes = [8, 16], strides = [1, 1]} : vector<16x96xf32> to vector<8x16xf32>
    %238 = vector.extract_strided_slice %204 {offsets = [8, 64], sizes = [8, 16], strides = [1, 1]} : vector<16x96xf32> to vector<8x16xf32>
    %cst_105 = arith.constant dense<0.000000e+00> : vector<8x8xf32>
    %239 = tpu.matmul %236, %237, %cst_105 {dimension_numbers = #tpu.dot_dimension_numbers<[1], [1], [0], [0], [0, 0, 1, 0], [], []>} : vector<8x16xf32>, vector<8x16xf32>, vector<8x8xf32> -> vector<8x8xf32>
    %cst_106 = arith.constant dense<0xFF800000> : vector<8xf32>
    %240 = vector.multi_reduction <maximumf>, %239, %cst_106 [1] : vector<8x8xf32> to vector<8xf32>
    %241 = vector.shape_cast %240 : vector<8xf32> to vector<8x1xf32>
    %242 = vector.broadcast %241 : vector<8x1xf32> to vector<8x8xf32>
    %243 = arith.subf %239, %242 : vector<8x8xf32>
    %244 = math.exp %243 : vector<8x8xf32>
    %cst_107 = arith.constant dense<0.000000e+00> : vector<8xf32>
    %245 = vector.multi_reduction <add>, %244, %cst_107 [1] : vector<8x8xf32> to vector<8xf32>
    %246 = vector.shape_cast %245 : vector<8xf32> to vector<8x1xf32>
    %247 = tpu.reciprocal %246 {approx = true} : vector<8x1xf32> -> vector<8x1xf32>
    %248 = vector.broadcast %247 : vector<8x1xf32> to vector<8x8xf32>
    %249 = arith.mulf %244, %248 : vector<8x8xf32>
    %cst_108 = arith.constant dense<0.000000e+00> : vector<8x16xf32>
    %250 = tpu.matmul %249, %238, %cst_108 {dimension_numbers = #tpu.dot_dimension_numbers<[1], [0], [0], [1], [0, 0, 1, 1], [], []>} : vector<8x8xf32>, vector<8x16xf32>, vector<8x16xf32> -> vector<8x16xf32>
    %251 = vector.extract_strided_slice %204 {offsets = [8, 16], sizes = [8, 16], strides = [1, 1]} : vector<16x96xf32> to vector<8x16xf32>
    %252 = vector.extract_strided_slice %204 {offsets = [8, 48], sizes = [8, 16], strides = [1, 1]} : vector<16x96xf32> to vector<8x16xf32>
    %253 = vector.extract_strided_slice %204 {offsets = [8, 80], sizes = [8, 16], strides = [1, 1]} : vector<16x96xf32> to vector<8x16xf32>
    %cst_109 = arith.constant dense<0.000000e+00> : vector<8x8xf32>
    %254 = tpu.matmul %251, %252, %cst_109 {dimension_numbers = #tpu.dot_dimension_numbers<[1], [1], [0], [0], [0, 0, 1, 0], [], []>} : vector<8x16xf32>, vector<8x16xf32>, vector<8x8xf32> -> vector<8x8xf32>
    %cst_110 = arith.constant dense<0xFF800000> : vector<8xf32>
    %255 = vector.multi_reduction <maximumf>, %254, %cst_110 [1] : vector<8x8xf32> to vector<8xf32>
    %256 = vector.shape_cast %255 : vector<8xf32> to vector<8x1xf32>
    %257 = vector.broadcast %256 : vector<8x1xf32> to vector<8x8xf32>
    %258 = arith.subf %254, %257 : vector<8x8xf32>
    %259 = math.exp %258 : vector<8x8xf32>
    %cst_111 = arith.constant dense<0.000000e+00> : vector<8xf32>
    %260 = vector.multi_reduction <add>, %259, %cst_111 [1] : vector<8x8xf32> to vector<8xf32>
    %261 = vector.shape_cast %260 : vector<8xf32> to vector<8x1xf32>
    %262 = tpu.reciprocal %261 {approx = true} : vector<8x1xf32> -> vector<8x1xf32>
    %263 = vector.broadcast %262 : vector<8x1xf32> to vector<8x8xf32>
    %264 = arith.mulf %259, %263 : vector<8x8xf32>
    %cst_112 = arith.constant dense<0.000000e+00> : vector<8x16xf32>
    %265 = tpu.matmul %264, %253, %cst_112 {dimension_numbers = #tpu.dot_dimension_numbers<[1], [0], [0], [1], [0, 0, 1, 1], [], []>} : vector<8x8xf32>, vector<8x16xf32>, vector<8x16xf32> -> vector<8x16xf32>
    %266 = tpu.concatenate %250, %265 in 1 : vector<8x16xf32>, vector<8x16xf32> -> vector<8x32xf32>
    %267 = tpu.concatenate %235, %266 in 0 : vector<8x32xf32>, vector<8x32xf32> -> vector<16x32xf32>
    %cst_113 = arith.constant dense<0.000000e+00> : vector<16x32xf32>
    %268 = tpu.matmul %267, %157, %cst_113 {dimension_numbers = #tpu.dot_dimension_numbers<[1], [0], [0], [1], [0, 0, 1, 1], [], []>} : vector<16x32xf32>, vector<32x32xf32>, vector<16x32xf32> -> vector<16x32xf32>
    %269 = arith.addf %268, %166 : vector<16x32xf32>
    %270 = arith.addf %269, %153 : vector<16x32xf32>
    %cst_114 = arith.constant dense<0.000000e+00> : vector<16xf32>
    %271 = vector.multi_reduction <add>, %270, %cst_114 [1] : vector<16x32xf32> to vector<16xf32>
    %272 = vector.shape_cast %271 : vector<16xf32> to vector<16x1xf32>
    %cst_115 = arith.constant 3.200000e+01 : f32
    %273 = vector.broadcast %cst_115 : f32 to vector<16x1xf32>
    %274 = arith.divf %272, %273 : vector<16x1xf32>
    %275 = vector.broadcast %274 : vector<16x1xf32> to vector<16x32xf32>
    %276 = arith.subf %270, %275 : vector<16x32xf32>
    %277 = arith.mulf %276, %276 : vector<16x32xf32>
    %cst_116 = arith.constant dense<0.000000e+00> : vector<16xf32>
    %278 = vector.multi_reduction <add>, %277, %cst_116 [1] : vector<16x32xf32> to vector<16xf32>
    %279 = vector.shape_cast %278 : vector<16xf32> to vector<16x1xf32>
    %cst_117 = arith.constant 3.200000e+01 : f32
    %280 = vector.broadcast %cst_117 : f32 to vector<16x1xf32>
    %281 = arith.divf %279, %280 : vector<16x1xf32>
    %cst_118 = arith.constant 9.99999996E-13 : f32
    %282 = vector.broadcast %cst_118 : f32 to vector<16x1xf32>
    %283 = arith.addf %281, %282 : vector<16x1xf32>
    %284 = math.rsqrt %283 : vector<16x1xf32>
    %285 = vector.broadcast %284 : vector<16x1xf32> to vector<16x32xf32>
    %286 = arith.mulf %276, %285 : vector<16x32xf32>
    %287 = arith.mulf %286, %181 : vector<16x32xf32>
    %288 = arith.addf %287, %184 : vector<16x32xf32>
    %cst_119 = arith.constant dense<0.000000e+00> : vector<16x64xf32>
    %289 = tpu.matmul %288, %159, %cst_119 {dimension_numbers = #tpu.dot_dimension_numbers<[1], [0], [0], [1], [0, 0, 1, 1], [], []>} : vector<16x32xf32>, vector<32x64xf32>, vector<16x64xf32> -> vector<16x64xf32>
    %290 = arith.addf %289, %169 : vector<16x64xf32>
    %291 = arith.mulf %290, %290 : vector<16x64xf32>
    %292 = arith.mulf %290, %291 : vector<16x64xf32>
    %cst_120 = arith.constant 4.471500e-02 : f32
    %293 = vector.broadcast %cst_120 : f32 to vector<16x64xf32>
    %294 = arith.mulf %293, %292 : vector<16x64xf32>
    %295 = arith.addf %290, %294 : vector<16x64xf32>
    %cst_121 = arith.constant 0.797884583 : f32
    %296 = vector.broadcast %cst_121 : f32 to vector<16x64xf32>
    %297 = arith.mulf %296, %295 : vector<16x64xf32>
    %298 = math.tanh %297 : vector<16x64xf32>
    %cst_122 = arith.constant 1.000000e+00 : f32
    %299 = vector.broadcast %cst_122 : f32 to vector<16x64xf32>
    %300 = arith.addf %299, %298 : vector<16x64xf32>
    %cst_123 = arith.constant 5.000000e-01 : f32
    %301 = vector.broadcast %cst_123 : f32 to vector<16x64xf32>
    %302 = arith.mulf %301, %300 : vector<16x64xf32>
    %303 = arith.mulf %290, %302 : vector<16x64xf32>
    %cst_124 = arith.constant dense<0.000000e+00> : vector<16x32xf32>
    %304 = tpu.matmul %303, %161, %cst_124 {dimension_numbers = #tpu.dot_dimension_numbers<[1], [0], [0], [1], [0, 0, 1, 1], [], []>} : vector<16x64xf32>, vector<64x32xf32>, vector<16x32xf32> -> vector<16x32xf32>
    %305 = arith.addf %304, %172 : vector<16x32xf32>
    %306 = arith.addf %305, %270 : vector<16x32xf32>
    %c0_125 = arith.constant 0 : index
    %c0_126 = arith.constant 0 : index
    %307 = vector.load %arg6[%c0_125, %c0_126] : memref<16x32xf32, #tpu.memory_space<vmem>>, vector<16x32xf32>
    tpu.vector_store %arg6[%c0_125, %c0_126], %306 {strides = array<i32>} : memref<16x32xf32, #tpu.memory_space<vmem>>, vector<16x32xf32>,
    return
  }
}

</mosaic_0001>

<llo_original>
// kernel: vit_encoder.1
$region0: #{vit_encoder.1}
  #allocation0 [shape = 'u32[]', space=smem, size = 0x4, offset = 0x4, fixed_abs, tag = 'smem constant byte address 0x4 - core index']
  #allocation1 [shape = 'u32[72,128]{1,0:T(1,128)}', space=vmem, size = 0x9000, scoped, tag = 'internal scratch']
  %s0 = inlined_call_operand.hbm [shape: f32[16,32], index: 0, kind: input, shape index: {}]
  %s1 = inlined_call_operand.vmem [shape: f32[2,32,96], index: 1, kind: input, shape index: {}]
  %s2 = inlined_call_operand.vmem [shape: f32[2,32,32], index: 2, kind: input, shape index: {}]
  %s3 = inlined_call_operand.vmem [shape: f32[2,32,64], index: 3, kind: input, shape index: {}]
  %s4 = inlined_call_operand.vmem [shape: f32[2,64,32], index: 4, kind: input, shape index: {}]
  %s5 = inlined_call_operand.hbm [shape: f32[16,16,96], index: 5, kind: input, shape index: {}]
  %s6 = inlined_call_operand.hbm [shape: f32[16,32], index: 6, kind: output, shape index: {}]
  %s7 = sld [smem:[#allocation0]]
  $region42: #{vit_encoder.1} parent=0
    _
  %s9 = ssub.s32 1, %s7
  %s10 = scalar_select 0, %s9, %s7
  $region1: #{vit_encoder.1} parent=0
    #allocation2 [shape = 'u8[8192]{0}', space=vmem, size = 0x2000, scoped, tag = 'input window, operand 0, single buffered']
    #allocation3 [shape = 's32[1]{0}', space=sflag, size = 0x4, scoped, tag = 'scoped memory for vit_encoder.1']
    #allocation4 [shape = 's32[1]{0}', space=sflag, size = 0x4, scoped, tag = 'scoped memory for vit_encoder.1']
    #allocation5 [shape = 'u8[131072]{0}', space=vmem, size = 0x20000, scoped, tag = 'input window, operand 5, single buffered']
    #allocation6 [shape = 's32[1]{0}', space=sflag, size = 0x4, scoped, tag = 'scoped memory for vit_encoder.1']
    #allocation7 [shape = 'u8[8192]{0}', space=vmem, size = 0x2000, scoped, tag = 'output window, operand 0, single buffered']
    %11 = vsyncpa [#allocation3], 0
    %12 = vsyncpa [#allocation6], 0
    %13 = vsyncpa [#allocation4], 0
    // Predicated region
    $region2: #{vit_encoder.1} parent=1 // pred_check
      _
    $region3: #{vit_encoder.1} parent=1 // pred_check_branch
      %15 = sbr.rel (0) target = $region5
    $region4: #{vit_encoder.1} parent=1 // pred_region
      %17 = vsyncadd [#allocation3], 0
      %s18 = sshll.u32 %s0, 4
      %s19 = int_to_ptr.hbm [resolvable:$true] %s18
      %s20 = sshll.u32 [#allocation2], 4
      %s21 = int_to_ptr.vmem [resolvable:$true] %s20
      %26 = dma.hbm_to_vmem [thread:$0]  %s19, 256, %s21, [#allocation3], 128, 128, 8
    $region5: #{vit_encoder.1} parent=1 // pred_fallthru
      _
    // Predicated region
    $region6: #{vit_encoder.1} parent=1 // pred_check
      _
    $region7: #{vit_encoder.1} parent=1 // pred_check_branch
      %28 = sbr.rel (0) target = $region9
    $region8: #{vit_encoder.1} parent=1 // pred_region
      _
    $region9: #{vit_encoder.1} parent=1 // pred_fallthru
      _
    // Predicated region
    $region10: #{vit_encoder.1} parent=1 // pred_check
      _
    $region11: #{vit_encoder.1} parent=1 // pred_check_branch
      %30 = sbr.rel (0) target = $region13
    $region12: #{vit_encoder.1} parent=1 // pred_region
      _
    $region13: #{vit_encoder.1} parent=1 // pred_fallthru
      _
    // Predicated region
    $region14: #{vit_encoder.1} parent=1 // pred_check
      _
    $region15: #{vit_encoder.1} parent=1 // pred_check_branch
      %32 = sbr.rel (0) target = $region17
    $region16: #{vit_encoder.1} parent=1 // pred_region
      _
    $region17: #{vit_encoder.1} parent=1 // pred_fallthru
      _
    // Predicated region
    $region18: #{vit_encoder.1} parent=1 // pred_check
      _
    $region19: #{vit_encoder.1} parent=1 // pred_check_branch
      %34 = sbr.rel (0) target = $region21
    $region20: #{vit_encoder.1} parent=1 // pred_region
      _
    $region21: #{vit_encoder.1} parent=1 // pred_fallthru
      _
    // Predicated region
    $region22: #{vit_encoder.1} parent=1 // pred_check
      _
    $region23: #{vit_encoder.1} parent=1 // pred_check_branch
      %36 = sbr.rel (0) target = $region25
    $region24: #{vit_encoder.1} parent=1 // pred_region
      %38 = vsyncadd [#allocation6], 0
      %s39 = sshll.u32 %s5, 4
      %s40 = int_to_ptr.hbm [resolvable:$true] %s39
      %s41 = sshll.u32 [#allocation5], 4
      %s42 = int_to_ptr.vmem [resolvable:$true] %s41
      %47 = dma.hbm_to_vmem [thread:$0]  %s40, 4096, %s42, [#allocation6], 128, 128, 8
    $region25: #{vit_encoder.1} parent=1 // pred_fallthru
      _
    // Predicated region
    $region26: #{vit_encoder.1} parent=1 // pred_check
      _
    $region27: #{vit_encoder.1} parent=1 // pred_check_branch
      %49 = sbr.rel (0) target = $region29
    $region28: #{vit_encoder.1} parent=1 // pred_region
      %51 = dma.done [#allocation3], 256
    $region29: #{vit_encoder.1} parent=1 // pred_fallthru
      _
    // Predicated region
    $region30: #{vit_encoder.1} parent=1 // pred_check
      _
    $region31: #{vit_encoder.1} parent=1 // pred_check_branch
      %53 = sbr.rel (0) target = $region33
    $region32: #{vit_encoder.1} parent=1 // pred_region
      %55 = dma.done [#allocation6], 4096
    $region33: #{vit_encoder.1} parent=1 // pred_fallthru
      _
    %v56 = vld [vmem:[#allocation2] sm:$0xff]
    %v57 = vld [vmem:[#allocation2 + $0x8] sm:$0xff]
    %v58 = vld [vmem:[%s1] sm:$0xff]
    %v59 = vld [vmem:[%s1 + $0x8] sm:$0xff]
    %v60 = vld [vmem:[%s1 + $0x10] sm:$0xff]
    %v61 = vld [vmem:[%s1 + $0x18] sm:$0xff]
    %v62 = vld [vmem:[%s2] sm:$0xff]
    %v63 = vld [vmem:[%s2 + $0x8] sm:$0xff]
    %v64 = vld [vmem:[%s2 + $0x10] sm:$0xff]
    %v65 = vld [vmem:[%s2 + $0x18] sm:$0xff]
    %v66 = vld [vmem:[%s3] sm:$0xff]
    %v67 = vld [vmem:[%s3 + $0x8] sm:$0xff]
    %v68 = vld [vmem:[%s3 + $0x10] sm:$0xff]
    %v69 = vld [vmem:[%s3 + $0x18] sm:$0xff]
    %v70 = vld [vmem:[%s4] sm:$0xff]
    %v71 = vld [vmem:[%s4 + $0x8] sm:$0xff]
    %v72 = vld [vmem:[%s4 + $0x10] sm:$0xff]
    %v73 = vld [vmem:[%s4 + $0x18] sm:$0xff]
    %v74 = vld [vmem:[%s4 + $0x20] sm:$0xff]
    %v75 = vld [vmem:[%s4 + $0x28] sm:$0xff]
    %v76 = vld [vmem:[%s4 + $0x30] sm:$0xff]
    %v77 = vld [vmem:[%s4 + $0x38] sm:$0xff]
    %v78 = vld [vmem:[#allocation5] sm:$0xff]
    %v79 = vld [vmem:[#allocation5 + $0x8] sm:$0xff]
    %s80 = scalar_lea.vmem [#allocation5], 16
    %v81 = vld [vmem:[%s80] sm:$0xff]
    %v82 = vld [vmem:[%s80 + $0x8] sm:$0xff]
    %s83 = scalar_lea.vmem [#allocation5], 32
    %v84 = vld [vmem:[%s83] sm:$0xff]
    %v85 = vld [vmem:[%s83 + $0x8] sm:$0xff]
    %s86 = scalar_lea.vmem [#allocation5], 48
    %v87 = vld [vmem:[%s86] sm:$0xff]
    %v88 = vld [vmem:[%s86 + $0x8] sm:$0xff]
    %s89 = scalar_lea.vmem [#allocation5], 64
    %v90 = vld [vmem:[%s89] sm:$0xff]
    %v91 = vld [vmem:[%s89 + $0x8] sm:$0xff]
    %s92 = scalar_lea.vmem [#allocation5], 80
    %v93 = vld [vmem:[%s92] sm:$0xff]
    %v94 = vld [vmem:[%s92 + $0x8] sm:$0xff]
    %s95 = scalar_lea.vmem [#allocation5], 96
    %v96 = vld [vmem:[%s95] sm:$0xff]
    %v97 = vld [vmem:[%s95 + $0x8] sm:$0xff]
    %s98 = scalar_lea.vmem [#allocation5], 112
    %v99 = vld [vmem:[%s98] sm:$0xff]
    %v100 = vld [vmem:[%s98 + $0x8] sm:$0xff]
    %vm101 = vcmask 261120
    %v102 = vsel %vm101, %v56, 0.0
    %103 = vadd.xlane.f32.xlu0 %v102
    %v104 = vpop.xlane.xlu0 %103
    %v105 = vsel %vm101, %v57, 0.0
    %106 = vadd.xlane.f32.xlu0 %v105
    %v107 = vpop.xlane.xlu0 %106
    %v108 = vrcp.pop 32.0
    %v109 = vmul.f32 32.0, %v108
    %v110 = vsub.f32 1.0, %v109
    %v111 = vmul.f32 %v108, %v110
    %v112 = vadd.f32 %v108, %v111
    %vm113 = vweird.f32 %v108
    %v114 = vsel %vm113, %v108, %v112
    %v115 = vmul.f32 %v104, %v114
    %v116 = vmul.f32 %v107, %v114
    %v117 = vsub.f32 %v56, %v115
    %v118 = vsub.f32 %v57, %v116
    %v119 = vmul.f32 %v117, %v117
    %v120 = vmul.f32 %v118, %v118
    %v121 = vsel %vm101, %v119, 0.0
    %122 = vadd.xlane.f32.xlu0 %v121
    %v123 = vpop.xlane.xlu0 %122
    %v124 = vsel %vm101, %v120, 0.0
    %125 = vadd.xlane.f32.xlu0 %v124
    %v126 = vpop.xlane.xlu0 %125
    %v127 = vmul.f32 %v123, %v114
    %v128 = vmul.f32 %v126, %v114
    %v129 = vadd.f32 %v127, 1e-12
    %v130 = vadd.f32 %v128, 1e-12
    %v131 = vrsqrt.pop %v129
    %v132 = vmul.f32 %v131, %v129
    %v133 = vmul.f32 %v132, %v131
    %v134 = vmul.f32 0.5, %v133
    %v135 = vsub.f32 1.5, %v134
    %v136 = vmul.f32 %v131, %v135
    %vm137 = vweird.f32 %v129
    %vm138 = vweird.f32 %v131
    %vm139 = vmor %vm137, %vm138
    %v140 = vsel %vm139, %v131, %v136
    %v141 = vrsqrt.pop %v130
    %v142 = vmul.f32 %v141, %v130
    %v143 = vmul.f32 %v142, %v141
    %v144 = vmul.f32 0.5, %v143
    %v145 = vsub.f32 1.5, %v144
    %v146 = vmul.f32 %v141, %v145
    %vm147 = vweird.f32 %v130
    %vm148 = vweird.f32 %v141
    %vm149 = vmor %vm147, %vm148
    %v150 = vsel %vm149, %v141, %v146
    %v151 = vmul.f32 %v117, %v140
    %v152 = vmul.f32 %v118, %v150
    %v153 = vmul.f32 %v151, %v90
    %v154 = vmul.f32 %v152, %v91
    %v155 = vadd.f32 %v153, %v93
    %v156 = vadd.f32 %v154, %v94
    %v158 = vsel %vm101, %v155, 0
    %v161 = vsel %vm101, %v156, 0
    %163 = vmatpush.msra.mxu0 0.0
    %164 = vmatpush.msra.mxu0 0.0
    %165 = vmatpush.msra.mxu0 0.0
    %166 = vmatpush.msra.mxu0 0.0
    %167 = vmatpush.msra.mxu0 0.0
    %168 = vmatpush.msra.mxu0 0.0
    %169 = vmatpush.msra.mxu0 0.0
    %170 = vmatpush.msra.mxu0 0.0
    %171 = vmatpush.msra.mxu0 0.0
    %172 = vmatpush.msra.mxu0 0.0
    %173 = vmatpush.msra.mxu0 0.0
    %174 = vmatpush.msra.mxu0 0.0
    %175 = vmatpush.msra.mxu0 %v61
    %176 = vmatpush.msra.mxu0 %v60
    %177 = vmatpush.msra.mxu0 %v59
    %178 = vmatpush.msra.mxu0 %v58
    %179 = vmatmul.f32.gmra.mxu0 %v158
    %v180 = vpop.f32.mrf.mxu0
    %v181 = vadd.f32 %v78, %v180
    %182 = vmatmul.f32.gmra.mxu0 %v161
    %v183 = vpop.f32.mrf.mxu0
    %v184 = vadd.f32 %v79, %v183
    %185 = vdwg.mxu0
    %187 = vrot.lane.b32.xlu0 %v181, 96
    %v188 = vpop.permute.xlu0 %187
    %vm189 = vcmask 130048
    %v190 = vsel %vm189, %v181, 0
    %v192 = vsel %vm189, %v188, 0
    %194 = vmatpush.xpose.msra.mxu0 0.0
    %195 = vmatpush.xpose.msra.mxu0 0.0
    %196 = vmatpush.xpose.msra.mxu0 0.0
    %197 = vmatpush.xpose.msra.mxu0 0.0
    %198 = vmatpush.xpose.msra.mxu0 0.0
    %199 = vmatpush.xpose.msra.mxu0 0.0
    %200 = vmatpush.xpose.msra.mxu0 0.0
    %201 = vmatpush.xpose.msra.mxu0 0.0
    %202 = vmatpush.xpose.msra.mxu0 0.0
    %203 = vmatpush.xpose.msra.mxu0 0.0
    %204 = vmatpush.xpose.msra.mxu0 0.0
    %205 = vmatpush.xpose.msra.mxu0 0.0
    %206 = vmatpush.xpose.msra.mxu0 0.0
    %207 = vmatpush.xpose.msra.mxu0 0.0
    %208 = vmatpush.xpose.msra.mxu0 0.0
    %209 = vmatpush.xpose.msra.mxu0 %v192
    %210 = vmatmul.f32.gmra.mxu0 %v190
    %v211 = vpop.f32.mrf.mxu0
    %v212 = vadd.f32 0.0, %v211
    %213 = vdwg.mxu0
    %vm214 = vcmask 64512
    %v215 = vsel %vm214, %v212, -inf
    %216 = vmax.xlane.f32.xlu0 %v215
    %v217 = vpop.xlane.xlu0 %216
    %v218 = vsub.f32 %v212, %v217
    %v219 = vmul.f32 %v218, 1.442695
    %v220 = vpow.pop %v219
    %v221 = vsel %vm214, %v220, 0.0
    %222 = vadd.xlane.f32.xlu0 %v221
    %v223 = vpop.xlane.xlu0 %222
    %v224 = vrcp.pop %v223
    %v225 = vmul.f32 %v220, %v224
    %226 = vrot.lane.b32.xlu0 %v181, 64
    %v227 = vpop.permute.xlu0 %226
    %v230 = vsel %vm214, %v225, 0
    %232 = vmatpush.msra.mxu0 0.0
    %233 = vmatpush.msra.mxu0 0.0
    %234 = vmatpush.msra.mxu0 0.0
    %235 = vmatpush.msra.mxu0 0.0
    %236 = vmatpush.msra.mxu0 0.0
    %237 = vmatpush.msra.mxu0 0.0
    %238 = vmatpush.msra.mxu0 0.0
    %239 = vmatpush.msra.mxu0 0.0
    %240 = vmatpush.msra.mxu0 0.0
    %241 = vmatpush.msra.mxu0 0.0
    %242 = vmatpush.msra.mxu0 0.0
    %243 = vmatpush.msra.mxu0 0.0
    %244 = vmatpush.msra.mxu0 0.0
    %245 = vmatpush.msra.mxu0 0.0
    %246 = vmatpush.msra.mxu0 0.0
    %247 = vmatpush.msra.mxu0 %v227
    %248 = vmatmul.f32.gmra.mxu0 %v230
    %v249 = vpop.f32.mrf.mxu0
    %v250 = vadd.f32 0.0, %v249
    %251 = vdwg.mxu0
    %252 = vrot.lane.b32.xlu0 %v181, 112
    %v253 = vpop.permute.xlu0 %252
    %254 = vrot.lane.b32.xlu0 %v181, 80
    %v255 = vpop.permute.xlu0 %254
    %v256 = vsel %vm189, %v253, 0
    %v258 = vsel %vm189, %v255, 0
    %260 = vmatpush.xpose.msra.mxu0 0.0
    %261 = vmatpush.xpose.msra.mxu0 0.0
    %262 = vmatpush.xpose.msra.mxu0 0.0
    %263 = vmatpush.xpose.msra.mxu0 0.0
    %264 = vmatpush.xpose.msra.mxu0 0.0
    %265 = vmatpush.xpose.msra.mxu0 0.0
    %266 = vmatpush.xpose.msra.mxu0 0.0
    %267 = vmatpush.xpose.msra.mxu0 0.0
    %268 = vmatpush.xpose.msra.mxu0 0.0
    %269 = vmatpush.xpose.msra.mxu0 0.0
    %270 = vmatpush.xpose.msra.mxu0 0.0
    %271 = vmatpush.xpose.msra.mxu0 0.0
    %272 = vmatpush.xpose.msra.mxu0 0.0
    %273 = vmatpush.xpose.msra.mxu0 0.0
    %274 = vmatpush.xpose.msra.mxu0 0.0
    %275 = vmatpush.xpose.msra.mxu0 %v258
    %276 = vmatmul.f32.gmra.mxu0 %v256
    %v277 = vpop.f32.mrf.mxu0
    %v278 = vadd.f32 0.0, %v277
    %279 = vdwg.mxu0
    %v280 = vsel %vm214, %v278, -inf
    %281 = vmax.xlane.f32.xlu0 %v280
    %v282 = vpop.xlane.xlu0 %281
    %v283 = vsub.f32 %v278, %v282
    %v284 = vmul.f32 %v283, 1.442695
    %v285 = vpow.pop %v284
    %v286 = vsel %vm214, %v285, 0.0
    %287 = vadd.xlane.f32.xlu0 %v286
    %v288 = vpop.xlane.xlu0 %287
    %v289 = vrcp.pop %v288
    %v290 = vmul.f32 %v285, %v289
    %291 = vrot.lane.b32.xlu0 %v181, 48
    %v292 = vpop.permute.xlu0 %291
    %v295 = vsel %vm214, %v290, 0
    %297 = vmatpush.msra.mxu0 0.0
    %298 = vmatpush.msra.mxu0 0.0
    %299 = vmatpush.msra.mxu0 0.0
    %300 = vmatpush.msra.mxu0 0.0
    %301 = vmatpush.msra.mxu0 0.0
    %302 = vmatpush.msra.mxu0 0.0
    %303 = vmatpush.msra.mxu0 0.0
    %304 = vmatpush.msra.mxu0 0.0
    %305 = vmatpush.msra.mxu0 0.0
    %306 = vmatpush.msra.mxu0 0.0
    %307 = vmatpush.msra.mxu0 0.0
    %308 = vmatpush.msra.mxu0 0.0
    %309 = vmatpush.msra.mxu0 0.0
    %310 = vmatpush.msra.mxu0 0.0
    %311 = vmatpush.msra.mxu0 0.0
    %312 = vmatpush.msra.mxu0 %v292
    %313 = vmatmul.f32.gmra.mxu0 %v295
    %v314 = vpop.f32.mrf.mxu0
    %v315 = vadd.f32 0.0, %v314
    %316 = vdwg.mxu0
    %318 = vrot.lane.b32.xlu0 %v315, 16
    %v319 = vpop.permute.xlu0 %318
    %v321 = vsel %vm189, %v250, %v319
    %323 = vrot.lane.b32.xlu0 %v184, 96
    %v324 = vpop.permute.xlu0 %323
    %v325 = vsel %vm189, %v184, 0
    %v327 = vsel %vm189, %v324, 0
    %329 = vmatpush.xpose.msra.mxu0 0.0
    %330 = vmatpush.xpose.msra.mxu0 0.0
    %331 = vmatpush.xpose.msra.mxu0 0.0
    %332 = vmatpush.xpose.msra.mxu0 0.0
    %333 = vmatpush.xpose.msra.mxu0 0.0
    %334 = vmatpush.xpose.msra.mxu0 0.0
    %335 = vmatpush.xpose.msra.mxu0 0.0
    %336 = vmatpush.xpose.msra.mxu0 0.0
    %337 = vmatpush.xpose.msra.mxu0 0.0
    %338 = vmatpush.xpose.msra.mxu0 0.0
    %339 = vmatpush.xpose.msra.mxu0 0.0
    %340 = vmatpush.xpose.msra.mxu0 0.0
    %341 = vmatpush.xpose.msra.mxu0 0.0
    %342 = vmatpush.xpose.msra.mxu0 0.0
    %343 = vmatpush.xpose.msra.mxu0 0.0
    %344 = vmatpush.xpose.msra.mxu0 %v327
    %345 = vmatmul.f32.gmra.mxu0 %v325
    %v346 = vpop.f32.mrf.mxu0
    %v347 = vadd.f32 0.0, %v346
    %348 = vdwg.mxu0
    %v349 = vsel %vm214, %v347, -inf
    %350 = vmax.xlane.f32.xlu0 %v349
    %v351 = vpop.xlane.xlu0 %350
    %v352 = vsub.f32 %v347, %v351
    %v353 = vmul.f32 %v352, 1.442695
    %v354 = vpow.pop %v353
    %v355 = vsel %vm214, %v354, 0.0
    %356 = vadd.xlane.f32.xlu0 %v355
    %v357 = vpop.xlane.xlu0 %356
    %v358 = vrcp.pop %v357
    %v359 = vmul.f32 %v354, %v358
    %360 = vrot.lane.b32.xlu0 %v184, 64
    %v361 = vpop.permute.xlu0 %360
    %v364 = vsel %vm214, %v359, 0
    %366 = vmatpush.msra.mxu0 0.0
    %367 = vmatpush.msra.mxu0 0.0
    %368 = vmatpush.msra.mxu0 0.0
    %369 = vmatpush.msra.mxu0 0.0
    %370 = vmatpush.msra.mxu0 0.0
    %371 = vmatpush.msra.mxu0 0.0
    %372 = vmatpush.msra.mxu0 0.0
    %373 = vmatpush.msra.mxu0 0.0
    %374 = vmatpush.msra.mxu0 0.0
    %375 = vmatpush.msra.mxu0 0.0
    %376 = vmatpush.msra.mxu0 0.0
    %377 = vmatpush.msra.mxu0 0.0
    %378 = vmatpush.msra.mxu0 0.0
    %379 = vmatpush.msra.mxu0 0.0
    %380 = vmatpush.msra.mxu0 0.0
    %381 = vmatpush.msra.mxu0 %v361
    %382 = vmatmul.f32.gmra.mxu0 %v364
    %v383 = vpop.f32.mrf.mxu0
    %v384 = vadd.f32 0.0, %v383
    %385 = vdwg.mxu0
    %386 = vrot.lane.b32.xlu0 %v184, 112
    %v387 = vpop.permute.xlu0 %386
    %388 = vrot.lane.b32.xlu0 %v184, 80
    %v389 = vpop.permute.xlu0 %388
    %v390 = vsel %vm189, %v387, 0
    %v392 = vsel %vm189, %v389, 0
    %394 = vmatpush.xpose.msra.mxu0 0.0
    %395 = vmatpush.xpose.msra.mxu0 0.0
    %396 = vmatpush.xpose.msra.mxu0 0.0
    %397 = vmatpush.xpose.msra.mxu0 0.0
    %398 = vmatpush.xpose.msra.mxu0 0.0
    %399 = vmatpush.xpose.msra.mxu0 0.0
    %400 = vmatpush.xpose.msra.mxu0 0.0
    %401 = vmatpush.xpose.msra.mxu0 0.0
    %402 = vmatpush.xpose.msra.mxu0 0.0
    %403 = vmatpush.xpose.msra.mxu0 0.0
    %404 = vmatpush.xpose.msra.mxu0 0.0
    %405 = vmatpush.xpose.msra.mxu0 0.0
    %406 = vmatpush.xpose.msra.mxu0 0.0
    %407 = vmatpush.xpose.msra.mxu0 0.0
    %408 = vmatpush.xpose.msra.mxu0 0.0
    %409 = vmatpush.xpose.msra.mxu0 %v392
    %410 = vmatmul.f32.gmra.mxu0 %v390
    %v411 = vpop.f32.mrf.mxu0
    %v412 = vadd.f32 0.0, %v411
    %413 = vdwg.mxu0
    %v414 = vsel %vm214, %v412, -inf
    %415 = vmax.xlane.f32.xlu0 %v414
    %v416 = vpop.xlane.xlu0 %415
    %v417 = vsub.f32 %v412, %v416
    %v418 = vmul.f32 %v417, 1.442695
    %v419 = vpow.pop %v418
    %v420 = vsel %vm214, %v419, 0.0
    %421 = vadd.xlane.f32.xlu0 %v420
    %v422 = vpop.xlane.xlu0 %421
    %v423 = vrcp.pop %v422
    %v424 = vmul.f32 %v419, %v423
    %425 = vrot.lane.b32.xlu0 %v184, 48
    %v426 = vpop.permute.xlu0 %425
    %v429 = vsel %vm214, %v424, 0
    %431 = vmatpush.msra.mxu0 0.0
    %432 = vmatpush.msra.mxu0 0.0
    %433 = vmatpush.msra.mxu0 0.0
    %434 = vmatpush.msra.mxu0 0.0
    %435 = vmatpush.msra.mxu0 0.0
    %436 = vmatpush.msra.mxu0 0.0
    %437 = vmatpush.msra.mxu0 0.0
    %438 = vmatpush.msra.mxu0 0.0
    %439 = vmatpush.msra.mxu0 0.0
    %440 = vmatpush.msra.mxu0 0.0
    %441 = vmatpush.msra.mxu0 0.0
    %442 = vmatpush.msra.mxu0 0.0
    %443 = vmatpush.msra.mxu0 0.0
    %444 = vmatpush.msra.mxu0 0.0
    %445 = vmatpush.msra.mxu0 0.0
    %446 = vmatpush.msra.mxu0 %v426
    %447 = vmatmul.f32.gmra.mxu0 %v429
    %v448 = vpop.f32.mrf.mxu0
    %v449 = vadd.f32 0.0, %v448
    %450 = vdwg.mxu0
    %452 = vrot.lane.b32.xlu0 %v449, 16
    %v453 = vpop.permute.xlu0 %452
    %v455 = vsel %vm189, %v384, %v453
    %v457 = vsel %vm101, %v321, 0
    %v460 = vsel %vm101, %v455, 0
    %462 = vmatpush.msra.mxu0 0.0
    %463 = vmatpush.msra.mxu0 0.0
    %464 = vmatpush.msra.mxu0 0.0
    %465 = vmatpush.msra.mxu0 0.0
    %466 = vmatpush.msra.mxu0 0.0
    %467 = vmatpush.msra.mxu0 0.0
    %468 = vmatpush.msra.mxu0 0.0
    %469 = vmatpush.msra.mxu0 0.0
    %470 = vmatpush.msra.mxu0 0.0
    %471 = vmatpush.msra.mxu0 0.0
    %472 = vmatpush.msra.mxu0 0.0
    %473 = vmatpush.msra.mxu0 0.0
    %474 = vmatpush.msra.mxu0 %v65
    %475 = vmatpush.msra.mxu0 %v64
    %476 = vmatpush.msra.mxu0 %v63
    %477 = vmatpush.msra.mxu0 %v62
    %478 = vmatmul.f32.gmra.mxu0 %v457
    %v479 = vpop.f32.mrf.mxu0
    %v480 = vadd.f32 %v81, %v479
    %481 = vmatmul.f32.gmra.mxu0 %v460
    %v482 = vpop.f32.mrf.mxu0
    %v483 = vadd.f32 %v82, %v482
    %484 = vdwg.mxu0
    %v485 = vadd.f32 %v480, %v56
    %v486 = vadd.f32 %v483, %v57
    %v487 = vsel %vm101, %v485, 0.0
    %488 = vadd.xlane.f32.xlu0 %v487
    %v489 = vpop.xlane.xlu0 %488
    %v490 = vsel %vm101, %v486, 0.0
    %491 = vadd.xlane.f32.xlu0 %v490
    %v492 = vpop.xlane.xlu0 %491
    %v493 = vmul.f32 %v489, %v114
    %v494 = vmul.f32 %v492, %v114
    %v495 = vsub.f32 %v485, %v493
    %v496 = vsub.f32 %v486, %v494
    %v497 = vmul.f32 %v495, %v495
    %v498 = vmul.f32 %v496, %v496
    %v499 = vsel %vm101, %v497, 0.0
    %500 = vadd.xlane.f32.xlu0 %v499
    %v501 = vpop.xlane.xlu0 %500
    %v502 = vsel %vm101, %v498, 0.0
    %503 = vadd.xlane.f32.xlu0 %v502
    %v504 = vpop.xlane.xlu0 %503
    %v505 = vmul.f32 %v501, %v114
    %v506 = vmul.f32 %v504, %v114
    %v507 = vadd.f32 %v505, 1e-12
    %v508 = vadd.f32 %v506, 1e-12
    %v509 = vrsqrt.pop %v507
    %v510 = vmul.f32 %v509, %v507
    %v511 = vmul.f32 %v510, %v509
    %v512 = vmul.f32 0.5, %v511
    %v513 = vsub.f32 1.5, %v512
    %v514 = vmul.f32 %v509, %v513
    %vm515 = vweird.f32 %v507
    %vm516 = vweird.f32 %v509
    %vm517 = vmor %vm515, %vm516
    %v518 = vsel %vm517, %v509, %v514
    %v519 = vrsqrt.pop %v508
    %v520 = vmul.f32 %v519, %v508
    %v521 = vmul.f32 %v520, %v519
    %v522 = vmul.f32 0.5, %v521
    %v523 = vsub.f32 1.5, %v522
    %v524 = vmul.f32 %v519, %v523
    %vm525 = vweird.f32 %v508
    %vm526 = vweird.f32 %v519
    %vm527 = vmor %vm525, %vm526
    %v528 = vsel %vm527, %v519, %v524
    %v529 = vmul.f32 %v495, %v518
    %v530 = vmul.f32 %v496, %v528
    %v531 = vmul.f32 %v529, %v96
    %v532 = vmul.f32 %v530, %v97
    %v533 = vadd.f32 %v531, %v99
    %v534 = vadd.f32 %v532, %v100
    %v536 = vsel %vm101, %v533, 0
    %v539 = vsel %vm101, %v534, 0
    %541 = vmatpush.msra.mxu0 0.0
    %542 = vmatpush.msra.mxu0 0.0
    %543 = vmatpush.msra.mxu0 0.0
    %544 = vmatpush.msra.mxu0 0.0
    %545 = vmatpush.msra.mxu0 0.0
    %546 = vmatpush.msra.mxu0 0.0
    %547 = vmatpush.msra.mxu0 0.0
    %548 = vmatpush.msra.mxu0 0.0
    %549 = vmatpush.msra.mxu0 0.0
    %550 = vmatpush.msra.mxu0 0.0
    %551 = vmatpush.msra.mxu0 0.0
    %552 = vmatpush.msra.mxu0 0.0
    %553 = vmatpush.msra.mxu0 %v69
    %554 = vmatpush.msra.mxu0 %v68
    %555 = vmatpush.msra.mxu0 %v67
    %556 = vmatpush.msra.mxu0 %v66
    %557 = vmatmul.f32.gmra.mxu0 %v536
    %v558 = vpop.f32.mrf.mxu0
    %v559 = vadd.f32 %v84, %v558
    %560 = vmatmul.f32.gmra.mxu0 %v539
    %v561 = vpop.f32.mrf.mxu0
    %v562 = vadd.f32 %v85, %v561
    %563 = vdwg.mxu0
    %v564 = vmul.f32 %v559, %v559
    %v565 = vmul.f32 %v562, %v562
    %v566 = vmul.f32 %v559, %v564
    %v567 = vmul.f32 %v562, %v565
    %v568 = vmul.f32 %v566, 0.044715
    %v569 = vmul.f32 %v567, 0.044715
    %v570 = vadd.f32 %v559, %v568
    %v571 = vadd.f32 %v562, %v569
    %v572 = vmul.f32 %v570, 0.7978846
    %v573 = vmul.f32 %v571, 0.7978846
    %v574 = vtanh.pop %v572
    %v575 = vtanh.pop %v573
    %v576 = vadd.f32 %v574, 1.0
    %v577 = vadd.f32 %v575, 1.0
    %v578 = vmul.f32 %v576, 0.5
    %v579 = vmul.f32 %v577, 0.5
    %v580 = vmul.f32 %v559, %v578
    %v581 = vmul.f32 %v562, %v579
    %vm582 = vcmask 523264
    %v584 = vsel %vm582, %v580, 0
    %v587 = vsel %vm582, %v581, 0
    %589 = vmatpush.msra.mxu0 0.0
    %590 = vmatpush.msra.mxu0 0.0
    %591 = vmatpush.msra.mxu0 0.0
    %592 = vmatpush.msra.mxu0 0.0
    %593 = vmatpush.msra.mxu0 0.0
    %594 = vmatpush.msra.mxu0 0.0
    %595 = vmatpush.msra.mxu0 0.0
    %596 = vmatpush.msra.mxu0 0.0
    %597 = vmatpush.msra.mxu0 %v77
    %598 = vmatpush.msra.mxu0 %v76
    %599 = vmatpush.msra.mxu0 %v75
    %600 = vmatpush.msra.mxu0 %v74
    %601 = vmatpush.msra.mxu0 %v73
    %602 = vmatpush.msra.mxu0 %v72
    %603 = vmatpush.msra.mxu0 %v71
    %604 = vmatpush.msra.mxu0 %v70
    %605 = vmatmul.f32.gmra.mxu0 %v584
    %v606 = vpop.f32.mrf.mxu0
    %v607 = vadd.f32 %v87, %v606
    %608 = vmatmul.f32.gmra.mxu0 %v587
    %v609 = vpop.f32.mrf.mxu0
    %v610 = vadd.f32 %v88, %v609
    %611 = vdwg.mxu0
    %v612 = vadd.f32 %v607, %v485
    %v613 = vadd.f32 %v610, %v486
    %s614 = scalar_lea.vmem %s1, 32
    %v615 = vld [vmem:[%s614] sm:$0xff]
    %v616 = vld [vmem:[%s614 + $0x8] sm:$0xff]
    %v617 = vld [vmem:[%s614 + $0x10] sm:$0xff]
    %v618 = vld [vmem:[%s614 + $0x18] sm:$0xff]
    %s619 = scalar_lea.vmem %s2, 32
    %v620 = vld [vmem:[%s619] sm:$0xff]
    %v621 = vld [vmem:[%s619 + $0x8] sm:$0xff]
    %v622 = vld [vmem:[%s619 + $0x10] sm:$0xff]
    %v623 = vld [vmem:[%s619 + $0x18] sm:$0xff]
    %s624 = scalar_lea.vmem %s3, 32
    %v625 = vld [vmem:[%s624] sm:$0xff]
    %v626 = vld [vmem:[%s624 + $0x8] sm:$0xff]
    %v627 = vld [vmem:[%s624 + $0x10] sm:$0xff]
    %v628 = vld [vmem:[%s624 + $0x18] sm:$0xff]
    %s629 = scalar_lea.vmem %s4, 64
    %v630 = vld [vmem:[%s629] sm:$0xff]
    %v631 = vld [vmem:[%s629 + $0x8] sm:$0xff]
    %v632 = vld [vmem:[%s629 + $0x10] sm:$0xff]
    %v633 = vld [vmem:[%s629 + $0x18] sm:$0xff]
    %v634 = vld [vmem:[%s629 + $0x20] sm:$0xff]
    %v635 = vld [vmem:[%s629 + $0x28] sm:$0xff]
    %v636 = vld [vmem:[%s629 + $0x30] sm:$0xff]
    %v637 = vld [vmem:[%s629 + $0x38] sm:$0xff]
    %s638 = scalar_lea.vmem [#allocation5], 128
    %v639 = vld [vmem:[%s638] sm:$0xff]
    %v640 = vld [vmem:[%s638 + $0x8] sm:$0xff]
    %s641 = scalar_lea.vmem [#allocation5], 144
    %v642 = vld [vmem:[%s641] sm:$0xff]
    %v643 = vld [vmem:[%s641 + $0x8] sm:$0xff]
    %s644 = scalar_lea.vmem [#allocation5], 160
    %v645 = vld [vmem:[%s644] sm:$0xff]
    %v646 = vld [vmem:[%s644 + $0x8] sm:$0xff]
    %s647 = scalar_lea.vmem [#allocation5], 176
    %v648 = vld [vmem:[%s647] sm:$0xff]
    %v649 = vld [vmem:[%s647 + $0x8] sm:$0xff]
    %s650 = scalar_lea.vmem [#allocation5], 192
    %v651 = vld [vmem:[%s650] sm:$0xff]
    %v652 = vld [vmem:[%s650 + $0x8] sm:$0xff]
    %s653 = scalar_lea.vmem [#allocation5], 208
    %v654 = vld [vmem:[%s653] sm:$0xff]
    %v655 = vld [vmem:[%s653 + $0x8] sm:$0xff]
    %s656 = scalar_lea.vmem [#allocation5], 224
    %v657 = vld [vmem:[%s656] sm:$0xff]
    %v658 = vld [vmem:[%s656 + $0x8] sm:$0xff]
    %s659 = scalar_lea.vmem [#allocation5], 240
    %v660 = vld [vmem:[%s659] sm:$0xff]
    %v661 = vld [vmem:[%s659 + $0x8] sm:$0xff]
    %v662 = vsel %vm101, %v612, 0.0
    %663 = vadd.xlane.f32.xlu0 %v662
    %v664 = vpop.xlane.xlu0 %663
    %v665 = vsel %vm101, %v613, 0.0
    %666 = vadd.xlane.f32.xlu0 %v665
    %v667 = vpop.xlane.xlu0 %666
    %v668 = vmul.f32 %v664, %v114
    %v669 = vmul.f32 %v667, %v114
    %v670 = vsub.f32 %v612, %v668
    %v671 = vsub.f32 %v613, %v669
    %v672 = vmul.f32 %v670, %v670
    %v673 = vmul.f32 %v671, %v671
    %v674 = vsel %vm101, %v672, 0.0
    %675 = vadd.xlane.f32.xlu0 %v674
    %v676 = vpop.xlane.xlu0 %675
    %v677 = vsel %vm101, %v673, 0.0
    %678 = vadd.xlane.f32.xlu0 %v677
    %v679 = vpop.xlane.xlu0 %678
    %v680 = vmul.f32 %v676, %v114
    %v681 = vmul.f32 %v679, %v114
    %v682 = vadd.f32 %v680, 1e-12
    %v683 = vadd.f32 %v681, 1e-12
    %v684 = vrsqrt.pop %v682
    %v685 = vmul.f32 %v684, %v682
    %v686 = vmul.f32 %v685, %v684
    %v687 = vmul.f32 0.5, %v686
    %v688 = vsub.f32 1.5, %v687
    %v689 = vmul.f32 %v684, %v688
    %vm690 = vweird.f32 %v682
    %vm691 = vweird.f32 %v684
    %vm692 = vmor %vm690, %vm691
    %v693 = vsel %vm692, %v684, %v689
    %v694 = vrsqrt.pop %v683
    %v695 = vmul.f32 %v694, %v683
    %v696 = vmul.f32 %v695, %v694
    %v697 = vmul.f32 0.5, %v696
    %v698 = vsub.f32 1.5, %v697
    %v699 = vmul.f32 %v694, %v698
    %vm700 = vweird.f32 %v683
    %vm701 = vweird.f32 %v694
    %vm702 = vmor %vm700, %vm701
    %v703 = vsel %vm702, %v694, %v699
    %v704 = vmul.f32 %v670, %v693
    %v705 = vmul.f32 %v671, %v703
    %v706 = vmul.f32 %v704, %v651
    %v707 = vmul.f32 %v705, %v652
    %v708 = vadd.f32 %v706, %v654
    %v709 = vadd.f32 %v707, %v655
    %v711 = vsel %vm101, %v708, 0
    %v714 = vsel %vm101, %v709, 0
    %716 = vmatpush.msra.mxu0 0.0
    %717 = vmatpush.msra.mxu0 0.0
    %718 = vmatpush.msra.mxu0 0.0
    %719 = vmatpush.msra.mxu0 0.0
    %720 = vmatpush.msra.mxu0 0.0
    %721 = vmatpush.msra.mxu0 0.0
    %722 = vmatpush.msra.mxu0 0.0
    %723 = vmatpush.msra.mxu0 0.0
    %724 = vmatpush.msra.mxu0 0.0
    %725 = vmatpush.msra.mxu0 0.0
    %726 = vmatpush.msra.mxu0 0.0
    %727 = vmatpush.msra.mxu0 0.0
    %728 = vmatpush.msra.mxu0 %v618
    %729 = vmatpush.msra.mxu0 %v617
    %730 = vmatpush.msra.mxu0 %v616
    %731 = vmatpush.msra.mxu0 %v615
    %732 = vmatmul.f32.gmra.mxu0 %v711
    %v733 = vpop.f32.mrf.mxu0
    %v734 = vadd.f32 %v639, %v733
    %735 = vmatmul.f32.gmra.mxu0 %v714
    %v736 = vpop.f32.mrf.mxu0
    %v737 = vadd.f32 %v640, %v736
    %738 = vdwg.mxu0
    %740 = vrot.lane.b32.xlu0 %v734, 96
    %v741 = vpop.permute.xlu0 %740
    %v742 = vsel %vm189, %v734, 0
    %v744 = vsel %vm189, %v741, 0
    %746 = vmatpush.xpose.msra.mxu0 0.0
    %747 = vmatpush.xpose.msra.mxu0 0.0
    %748 = vmatpush.xpose.msra.mxu0 0.0
    %749 = vmatpush.xpose.msra.mxu0 0.0
    %750 = vmatpush.xpose.msra.mxu0 0.0
    %751 = vmatpush.xpose.msra.mxu0 0.0
    %752 = vmatpush.xpose.msra.mxu0 0.0
    %753 = vmatpush.xpose.msra.mxu0 0.0
    %754 = vmatpush.xpose.msra.mxu0 0.0
    %755 = vmatpush.xpose.msra.mxu0 0.0
    %756 = vmatpush.xpose.msra.mxu0 0.0
    %757 = vmatpush.xpose.msra.mxu0 0.0
    %758 = vmatpush.xpose.msra.mxu0 0.0
    %759 = vmatpush.xpose.msra.mxu0 0.0
    %760 = vmatpush.xpose.msra.mxu0 0.0
    %761 = vmatpush.xpose.msra.mxu0 %v744
    %762 = vmatmul.f32.gmra.mxu0 %v742
    %v763 = vpop.f32.mrf.mxu0
    %v764 = vadd.f32 0.0, %v763
    %765 = vdwg.mxu0
    %v766 = vsel %vm214, %v764, -inf
    %767 = vmax.xlane.f32.xlu0 %v766
    %v768 = vpop.xlane.xlu0 %767
    %v769 = vsub.f32 %v764, %v768
    %v770 = vmul.f32 %v769, 1.442695
    %v771 = vpow.pop %v770
    %v772 = vsel %vm214, %v771, 0.0
    %773 = vadd.xlane.f32.xlu0 %v772
    %v774 = vpop.xlane.xlu0 %773
    %v775 = vrcp.pop %v774
    %v776 = vmul.f32 %v771, %v775
    %777 = vrot.lane.b32.xlu0 %v734, 64
    %v778 = vpop.permute.xlu0 %777
    %v781 = vsel %vm214, %v776, 0
    %783 = vmatpush.msra.mxu0 0.0
    %784 = vmatpush.msra.mxu0 0.0
    %785 = vmatpush.msra.mxu0 0.0
    %786 = vmatpush.msra.mxu0 0.0
    %787 = vmatpush.msra.mxu0 0.0
    %788 = vmatpush.msra.mxu0 0.0
    %789 = vmatpush.msra.mxu0 0.0
    %790 = vmatpush.msra.mxu0 0.0
    %791 = vmatpush.msra.mxu0 0.0
    %792 = vmatpush.msra.mxu0 0.0
    %793 = vmatpush.msra.mxu0 0.0
    %794 = vmatpush.msra.mxu0 0.0
    %795 = vmatpush.msra.mxu0 0.0
    %796 = vmatpush.msra.mxu0 0.0
    %797 = vmatpush.msra.mxu0 0.0
    %798 = vmatpush.msra.mxu0 %v778
    %799 = vmatmul.f32.gmra.mxu0 %v781
    %v800 = vpop.f32.mrf.mxu0
    %v801 = vadd.f32 0.0, %v800
    %802 = vdwg.mxu0
    %803 = vrot.lane.b32.xlu0 %v734, 112
    %v804 = vpop.permute.xlu0 %803
    %805 = vrot.lane.b32.xlu0 %v734, 80
    %v806 = vpop.permute.xlu0 %805
    %v807 = vsel %vm189, %v804, 0
    %v809 = vsel %vm189, %v806, 0
    %811 = vmatpush.xpose.msra.mxu0 0.0
    %812 = vmatpush.xpose.msra.mxu0 0.0
    %813 = vmatpush.xpose.msra.mxu0 0.0
    %814 = vmatpush.xpose.msra.mxu0 0.0
    %815 = vmatpush.xpose.msra.mxu0 0.0
    %816 = vmatpush.xpose.msra.mxu0 0.0
    %817 = vmatpush.xpose.msra.mxu0 0.0
    %818 = vmatpush.xpose.msra.mxu0 0.0
    %819 = vmatpush.xpose.msra.mxu0 0.0
    %820 = vmatpush.xpose.msra.mxu0 0.0
    %821 = vmatpush.xpose.msra.mxu0 0.0
    %822 = vmatpush.xpose.msra.mxu0 0.0
    %823 = vmatpush.xpose.msra.mxu0 0.0
    %824 = vmatpush.xpose.msra.mxu0 0.0
    %825 = vmatpush.xpose.msra.mxu0 0.0
    %826 = vmatpush.xpose.msra.mxu0 %v809
    %827 = vmatmul.f32.gmra.mxu0 %v807
    %v828 = vpop.f32.mrf.mxu0
    %v829 = vadd.f32 0.0, %v828
    %830 = vdwg.mxu0
    %v831 = vsel %vm214, %v829, -inf
    %832 = vmax.xlane.f32.xlu0 %v831
    %v833 = vpop.xlane.xlu0 %832
    %v834 = vsub.f32 %v829, %v833
    %v835 = vmul.f32 %v834, 1.442695
    %v836 = vpow.pop %v835
    %v837 = vsel %vm214, %v836, 0.0
    %838 = vadd.xlane.f32.xlu0 %v837
    %v839 = vpop.xlane.xlu0 %838
    %v840 = vrcp.pop %v839
    %v841 = vmul.f32 %v836, %v840
    %842 = vrot.lane.b32.xlu0 %v734, 48
    %v843 = vpop.permute.xlu0 %842
    %v846 = vsel %vm214, %v841, 0
    %848 = vmatpush.msra.mxu0 0.0
    %849 = vmatpush.msra.mxu0 0.0
    %850 = vmatpush.msra.mxu0 0.0
    %851 = vmatpush.msra.mxu0 0.0
    %852 = vmatpush.msra.mxu0 0.0
    %853 = vmatpush.msra.mxu0 0.0
    %854 = vmatpush.msra.mxu0 0.0
    %855 = vmatpush.msra.mxu0 0.0
    %856 = vmatpush.msra.mxu0 0.0
    %857 = vmatpush.msra.mxu0 0.0
    %858 = vmatpush.msra.mxu0 0.0
    %859 = vmatpush.msra.mxu0 0.0
    %860 = vmatpush.msra.mxu0 0.0
    %861 = vmatpush.msra.mxu0 0.0
    %862 = vmatpush.msra.mxu0 0.0
    %863 = vmatpush.msra.mxu0 %v843
    %864 = vmatmul.f32.gmra.mxu0 %v846
    %v865 = vpop.f32.mrf.mxu0
    %v866 = vadd.f32 0.0, %v865
    %867 = vdwg.mxu0
    %869 = vrot.lane.b32.xlu0 %v866, 16
    %v870 = vpop.permute.xlu0 %869
    %v872 = vsel %vm189, %v801, %v870
    %874 = vrot.lane.b32.xlu0 %v737, 96
    %v875 = vpop.permute.xlu0 %874
    %v876 = vsel %vm189, %v737, 0
    %v878 = vsel %vm189, %v875, 0
    %880 = vmatpush.xpose.msra.mxu0 0.0
    %881 = vmatpush.xpose.msra.mxu0 0.0
    %882 = vmatpush.xpose.msra.mxu0 0.0
    %883 = vmatpush.xpose.msra.mxu0 0.0
    %884 = vmatpush.xpose.msra.mxu0 0.0
    %885 = vmatpush.xpose.msra.mxu0 0.0
    %886 = vmatpush.xpose.msra.mxu0 0.0
    %887 = vmatpush.xpose.msra.mxu0 0.0
    %888 = vmatpush.xpose.msra.mxu0 0.0
    %889 = vmatpush.xpose.msra.mxu0 0.0
    %890 = vmatpush.xpose.msra.mxu0 0.0
    %891 = vmatpush.xpose.msra.mxu0 0.0
    %892 = vmatpush.xpose.msra.mxu0 0.0
    %893 = vmatpush.xpose.msra.mxu0 0.0
    %894 = vmatpush.xpose.msra.mxu0 0.0
    %895 = vmatpush.xpose.msra.mxu0 %v878
    %896 = vmatmul.f32.gmra.mxu0 %v876
    %v897 = vpop.f32.mrf.mxu0
    %v898 = vadd.f32 0.0, %v897
    %899 = vdwg.mxu0
    %v900 = vsel %vm214, %v898, -inf
    %901 = vmax.xlane.f32.xlu0 %v900
    %v902 = vpop.xlane.xlu0 %901
    %v903 = vsub.f32 %v898, %v902
    %v904 = vmul.f32 %v903, 1.442695
    %v905 = vpow.pop %v904
    %v906 = vsel %vm214, %v905, 0.0
    %907 = vadd.xlane.f32.xlu0 %v906
    %v908 = vpop.xlane.xlu0 %907
    %v909 = vrcp.pop %v908
    %v910 = vmul.f32 %v905, %v909
    %911 = vrot.lane.b32.xlu0 %v737, 64
    %v912 = vpop.permute.xlu0 %911
    %v915 = vsel %vm214, %v910, 0
    %917 = vmatpush.msra.mxu0 0.0
    %918 = vmatpush.msra.mxu0 0.0
    %919 = vmatpush.msra.mxu0 0.0
    %920 = vmatpush.msra.mxu0 0.0
    %921 = vmatpush.msra.mxu0 0.0
    %922 = vmatpush.msra.mxu0 0.0
    %923 = vmatpush.msra.mxu0 0.0
    %924 = vmatpush.msra.mxu0 0.0
    %925 = vmatpush.msra.mxu0 0.0
    %926 = vmatpush.msra.mxu0 0.0
    %927 = vmatpush.msra.mxu0 0.0
    %928 = vmatpush.msra.mxu0 0.0
    %929 = vmatpush.msra.mxu0 0.0
    %930 = vmatpush.msra.mxu0 0.0
    %931 = vmatpush.msra.mxu0 0.0
    %932 = vmatpush.msra.mxu0 %v912
    %933 = vmatmul.f32.gmra.mxu0 %v915
    %v934 = vpop.f32.mrf.mxu0
    %v935 = vadd.f32 0.0, %v934
    %936 = vdwg.mxu0
    %937 = vrot.lane.b32.xlu0 %v737, 112
    %v938 = vpop.permute.xlu0 %937
    %939 = vrot.lane.b32.xlu0 %v737, 80
    %v940 = vpop.permute.xlu0 %939
    %v941 = vsel %vm189, %v938, 0
    %v943 = vsel %vm189, %v940, 0
    %945 = vmatpush.xpose.msra.mxu0 0.0
    %946 = vmatpush.xpose.msra.mxu0 0.0
    %947 = vmatpush.xpose.msra.mxu0 0.0
    %948 = vmatpush.xpose.msra.mxu0 0.0
    %949 = vmatpush.xpose.msra.mxu0 0.0
    %950 = vmatpush.xpose.msra.mxu0 0.0
    %951 = vmatpush.xpose.msra.mxu0 0.0
    %952 = vmatpush.xpose.msra.mxu0 0.0
    %953 = vmatpush.xpose.msra.mxu0 0.0
    %954 = vmatpush.xpose.msra.mxu0 0.0
    %955 = vmatpush.xpose.msra.mxu0 0.0
    %956 = vmatpush.xpose.msra.mxu0 0.0
    %957 = vmatpush.xpose.msra.mxu0 0.0
    %958 = vmatpush.xpose.msra.mxu0 0.0
    %959 = vmatpush.xpose.msra.mxu0 0.0
    %960 = vmatpush.xpose.msra.mxu0 %v943
    %961 = vmatmul.f32.gmra.mxu0 %v941
    %v962 = vpop.f32.mrf.mxu0
    %v963 = vadd.f32 0.0, %v962
    %964 = vdwg.mxu0
    %v965 = vsel %vm214, %v963, -inf
    %966 = vmax.xlane.f32.xlu0 %v965
    %v967 = vpop.xlane.xlu0 %966
    %v968 = vsub.f32 %v963, %v967
    %v969 = vmul.f32 %v968, 1.442695
    %v970 = vpow.pop %v969
    %v971 = vsel %vm214, %v970, 0.0
    %972 = vadd.xlane.f32.xlu0 %v971
    %v973 = vpop.xlane.xlu0 %972
    %v974 = vrcp.pop %v973
    %v975 = vmul.f32 %v970, %v974
    %976 = vrot.lane.b32.xlu0 %v737, 48
    %v977 = vpop.permute.xlu0 %976
    %v980 = vsel %vm214, %v975, 0
    %982 = vmatpush.msra.mxu0 0.0
    %983 = vmatpush.msra.mxu0 0.0
    %984 = vmatpush.msra.mxu0 0.0
    %985 = vmatpush.msra.mxu0 0.0
    %986 = vmatpush.msra.mxu0 0.0
    %987 = vmatpush.msra.mxu0 0.0
    %988 = vmatpush.msra.mxu0 0.0
    %989 = vmatpush.msra.mxu0 0.0
    %990 = vmatpush.msra.mxu0 0.0
    %991 = vmatpush.msra.mxu0 0.0
    %992 = vmatpush.msra.mxu0 0.0
    %993 = vmatpush.msra.mxu0 0.0
    %994 = vmatpush.msra.mxu0 0.0
    %995 = vmatpush.msra.mxu0 0.0
    %996 = vmatpush.msra.mxu0 0.0
    %997 = vmatpush.msra.mxu0 %v977
    %998 = vmatmul.f32.gmra.mxu0 %v980
    %v999 = vpop.f32.mrf.mxu0
    %v1000 = vadd.f32 0.0, %v999
    %1001 = vdwg.mxu0
    %1003 = vrot.lane.b32.xlu0 %v1000, 16
    %v1004 = vpop.permute.xlu0 %1003
    %v1006 = vsel %vm189, %v935, %v1004
    %v1008 = vsel %vm101, %v872, 0
    %v1011 = vsel %vm101, %v1006, 0
    %1013 = vmatpush.msra.mxu0 0.0
    %1014 = vmatpush.msra.mxu0 0.0
    %1015 = vmatpush.msra.mxu0 0.0
    %1016 = vmatpush.msra.mxu0 0.0
    %1017 = vmatpush.msra.mxu0 0.0
    %1018 = vmatpush.msra.mxu0 0.0
    %1019 = vmatpush.msra.mxu0 0.0
    %1020 = vmatpush.msra.mxu0 0.0
    %1021 = vmatpush.msra.mxu0 0.0
    %1022 = vmatpush.msra.mxu0 0.0
    %1023 = vmatpush.msra.mxu0 0.0
    %1024 = vmatpush.msra.mxu0 0.0
    %1025 = vmatpush.msra.mxu0 %v623
    %1026 = vmatpush.msra.mxu0 %v622
    %1027 = vmatpush.msra.mxu0 %v621
    %1028 = vmatpush.msra.mxu0 %v620
    %1029 = vmatmul.f32.gmra.mxu0 %v1008
    %v1030 = vpop.f32.mrf.mxu0
    %v1031 = vadd.f32 %v642, %v1030
    %1032 = vmatmul.f32.gmra.mxu0 %v1011
    %v1033 = vpop.f32.mrf.mxu0
    %v1034 = vadd.f32 %v643, %v1033
    %1035 = vdwg.mxu0
    %v1036 = vadd.f32 %v1031, %v612
    %v1037 = vadd.f32 %v1034, %v613
    %v1038 = vsel %vm101, %v1036, 0.0
    %1039 = vadd.xlane.f32.xlu0 %v1038
    %v1040 = vpop.xlane.xlu0 %1039
    %v1041 = vsel %vm101, %v1037, 0.0
    %1042 = vadd.xlane.f32.xlu0 %v1041
    %v1043 = vpop.xlane.xlu0 %1042
    %v1044 = vmul.f32 %v1040, %v114
    %v1045 = vmul.f32 %v1043, %v114
    %v1046 = vsub.f32 %v1036, %v1044
    %v1047 = vsub.f32 %v1037, %v1045
    %v1048 = vmul.f32 %v1046, %v1046
    %v1049 = vmul.f32 %v1047, %v1047
    %v1050 = vsel %vm101, %v1048, 0.0
    %1051 = vadd.xlane.f32.xlu0 %v1050
    %v1052 = vpop.xlane.xlu0 %1051
    %v1053 = vsel %vm101, %v1049, 0.0
    %1054 = vadd.xlane.f32.xlu0 %v1053
    %v1055 = vpop.xlane.xlu0 %1054
    %v1056 = vmul.f32 %v1052, %v114
    %v1057 = vmul.f32 %v1055, %v114
    %v1058 = vadd.f32 %v1056, 1e-12
    %v1059 = vadd.f32 %v1057, 1e-12
    %v1060 = vrsqrt.pop %v1058
    %v1061 = vmul.f32 %v1060, %v1058
    %v1062 = vmul.f32 %v1061, %v1060
    %v1063 = vmul.f32 0.5, %v1062
    %v1064 = vsub.f32 1.5, %v1063
    %v1065 = vmul.f32 %v1060, %v1064
    %vm1066 = vweird.f32 %v1058
    %vm1067 = vweird.f32 %v1060
    %vm1068 = vmor %vm1066, %vm1067
    %v1069 = vsel %vm1068, %v1060, %v1065
    %v1070 = vrsqrt.pop %v1059
    %v1071 = vmul.f32 %v1070, %v1059
    %v1072 = vmul.f32 %v1071, %v1070
    %v1073 = vmul.f32 0.5, %v1072
    %v1074 = vsub.f32 1.5, %v1073
    %v1075 = vmul.f32 %v1070, %v1074
    %vm1076 = vweird.f32 %v1059
    %vm1077 = vweird.f32 %v1070
    %vm1078 = vmor %vm1076, %vm1077
    %v1079 = vsel %vm1078, %v1070, %v1075
    %v1080 = vmul.f32 %v1046, %v1069
    %v1081 = vmul.f32 %v1047, %v1079
    %v1082 = vmul.f32 %v1080, %v657
    %v1083 = vmul.f32 %v1081, %v658
    %v1084 = vadd.f32 %v1082, %v660
    %v1085 = vadd.f32 %v1083, %v661
    %v1087 = vsel %vm101, %v1084, 0
    %v1090 = vsel %vm101, %v1085, 0
    %1092 = vmatpush.msra.mxu0 0.0
    %1093 = vmatpush.msra.mxu0 0.0
    %1094 = vmatpush.msra.mxu0 0.0
    %1095 = vmatpush.msra.mxu0 0.0
    %1096 = vmatpush.msra.mxu0 0.0
    %1097 = vmatpush.msra.mxu0 0.0
    %1098 = vmatpush.msra.mxu0 0.0
    %1099 = vmatpush.msra.mxu0 0.0
    %1100 = vmatpush.msra.mxu0 0.0
    %1101 = vmatpush.msra.mxu0 0.0
    %1102 = vmatpush.msra.mxu0 0.0
    %1103 = vmatpush.msra.mxu0 0.0
    %1104 = vmatpush.msra.mxu0 %v628
    %1105 = vmatpush.msra.mxu0 %v627
    %1106 = vmatpush.msra.mxu0 %v626
    %1107 = vmatpush.msra.mxu0 %v625
    %1108 = vmatmul.f32.gmra.mxu0 %v1087
    %v1109 = vpop.f32.mrf.mxu0
    %v1110 = vadd.f32 %v645, %v1109
    %1111 = vmatmul.f32.gmra.mxu0 %v1090
    %v1112 = vpop.f32.mrf.mxu0
    %v1113 = vadd.f32 %v646, %v1112
    %1114 = vdwg.mxu0
    %v1115 = vmul.f32 %v1110, %v1110
    %v1116 = vmul.f32 %v1113, %v1113
    %v1117 = vmul.f32 %v1110, %v1115
    %v1118 = vmul.f32 %v1113, %v1116
    %v1119 = vmul.f32 %v1117, 0.044715
    %v1120 = vmul.f32 %v1118, 0.044715
    %v1121 = vadd.f32 %v1110, %v1119
    %v1122 = vadd.f32 %v1113, %v1120
    %v1123 = vmul.f32 %v1121, 0.7978846
    %v1124 = vmul.f32 %v1122, 0.7978846
    %v1125 = vtanh.pop %v1123
    %v1126 = vtanh.pop %v1124
    %v1127 = vadd.f32 %v1125, 1.0
    %v1128 = vadd.f32 %v1126, 1.0
    %v1129 = vmul.f32 %v1127, 0.5
    %v1130 = vmul.f32 %v1128, 0.5
    %v1131 = vmul.f32 %v1110, %v1129
    %v1132 = vmul.f32 %v1113, %v1130
    %v1134 = vsel %vm582, %v1131, 0
    %v1137 = vsel %vm582, %v1132, 0
    %1139 = vmatpush.msra.mxu0 0.0
    %1140 = vmatpush.msra.mxu0 0.0
    %1141 = vmatpush.msra.mxu0 0.0
    %1142 = vmatpush.msra.mxu0 0.0
    %1143 = vmatpush.msra.mxu0 0.0
    %1144 = vmatpush.msra.mxu0 0.0
    %1145 = vmatpush.msra.mxu0 0.0
    %1146 = vmatpush.msra.mxu0 0.0
    %1147 = vmatpush.msra.mxu0 %v637
    %1148 = vmatpush.msra.mxu0 %v636
    %1149 = vmatpush.msra.mxu0 %v635
    %1150 = vmatpush.msra.mxu0 %v634
    %1151 = vmatpush.msra.mxu0 %v633
    %1152 = vmatpush.msra.mxu0 %v632
    %1153 = vmatpush.msra.mxu0 %v631
    %1154 = vmatpush.msra.mxu0 %v630
    %1155 = vmatmul.f32.gmra.mxu0 %v1134
    %v1156 = vpop.f32.mrf.mxu0
    %v1157 = vadd.f32 %v648, %v1156
    %1158 = vmatmul.f32.gmra.mxu0 %v1137
    %v1159 = vpop.f32.mrf.mxu0
    %v1160 = vadd.f32 %v649, %v1159
    %1161 = vdwg.mxu0
    %v1162 = vadd.f32 %v1157, %v1036
    %v1163 = vadd.f32 %v1160, %v1037
    %1164 = vst.msk [vmem:[#allocation7] sm:$0xff] %vm101, %v1162
    %1165 = vst.msk [vmem:[#allocation7 + $0x8] sm:$0xff] %vm101, %v1163
    // Predicated region
    $region34: #{vit_encoder.1} parent=1 // pred_check
      _
    $region35: #{vit_encoder.1} parent=1 // pred_check_branch
      %1167 = sbr.rel (0) target = $region37
    $region36: #{vit_encoder.1} parent=1 // pred_region
      %1169 = vsyncadd [#allocation4], 0
      %s1170 = sshll.u32 [#allocation7], 4
      %s1171 = int_to_ptr.vmem [resolvable:$true] %s1170
      %s1172 = sshll.u32 %s6, 4
      %s1173 = int_to_ptr.hbm [resolvable:$true] %s1172
      %1178 = dma.vmem_to_hbm [thread:$0]  %s1171, 256, %s1173, [#allocation4], 128, 128, 8
    $region37: #{vit_encoder.1} parent=1 // pred_fallthru
      _
    // Predicated region
    $region38: #{vit_encoder.1} parent=1 // pred_check
      _
    $region39: #{vit_encoder.1} parent=1 // pred_check_branch
      %1180 = sbr.rel (0) target = $region41
    $region40: #{vit_encoder.1} parent=1 // pred_region
      %1182 = dma.done [#allocation4], 256
    $region41: #{vit_encoder.1} parent=1 // pred_fallthru
      _
    %1183 = vsyncpa [#allocation3], 1
    %1184 = vsyncpa [#allocation6], 1
    %1185 = vsyncpa [#allocation4], 1

</llo_original>
